<compile_context>
chip_gen: v5e
topology: v5e:2x2
jax: 0.10.0
libtpu: 0.0.40
codegen_flags: <defaults>
</compile_context>

<pallas_src>
import numpy as np
import jax
import jax.numpy as jnp
from jax import lax
from jax.experimental import pallas as pl
from jax.experimental.pallas import tpu as pltpu

# ---- fixed architecture dims (mymolGen defaults, real=True) -----------------
IN_FEAT = 30          # node feature dim
EN_H1 = 50            # en_hidden_dim1
EN_H2 = 100           # en_hidden_dim2
LAT = 50              # latent_dim
DEC_H1 = 100          # decoder_hid1
DEC_H2 = 200          # decoder_hid2
MAX_SMILE = 200       # fc_out width (real=True)
EMB_DIM = 200         # Embedding(200, 200)
RATIO = 0.8           # TopKPooling ratio
NEG = -1e30           # -inf substitute for masked max
PACK_W = 256          # lane width of the packed parameter buffer


def _round8(n):
    return -(-n // 8) * 8


# Packed-parameter layout: groups share a row block; each entry sits at lane
# offset 0 or 128 (narrow <=128-lane weights are packed side-by-side).
_GROUPS = [
    [('w2',     (EN_H1, EN_H2),        0), ('w1',     (IN_FEAT, EN_H1),  128)],
    [('b1',     (1, EN_H1),            0), ('b2',     (1, EN_H2),        128)],
    [('p1',     (1, EN_H1),            0), ('p2',     (1, EN_H2),        128)],
    [('wml_g',  (EN_H2, 2 * LAT),      0), ('wml_a',  (EN_H2, 2 * LAT),  128)],
    [('bml',    (1, 2 * LAT),          0), ('bd1',    (1, DEC_H1),       128)],
    [('wd1_l',  (EMB_DIM, DEC_H1),     0), ('wd1_zz', (2 * LAT, DEC_H1), 128)],
    [('wd2',    (DEC_H1, DEC_H2),      0)],
    [('bd2',    (1, DEC_H2),           0)],
    [('wo',     (DEC_H2, MAX_SMILE),   0)],
    [('bo',     (1, MAX_SMILE),        0)],
]


def _layout():
    offs, r = {}, 0
    for grp in _GROUPS:
        gh = max(_round8(shape[0]) for _, shape, _ in grp)
        for name, (h, wd), lo in grp:
            offs[name] = (r, lo, h, wd)   # (row0, lane0, rows, cols) — all static
        r += gh
    return offs, r


_OFFS, _PACK_ROWS = _layout()

# nbuf lane layout: [0:30 x | 128 mask | 129 k1(pool1) | 256:256+G Bmat^T | 384:384+N A]
C_MASK, C_K1, C_BMT, C_A = 128, 129, 256, 384
# gbuf lane layout: [0:200 relu(len_emb) | 256:356 [0|eps] | 384:384+N Bmat]
C_EPS, C_BM = 256, 384
# packed output lane layout: [0:200 recon | 256:356 [mu|logstd]]
C_RECON, C_ML, OUT_W = 0, 256, 384


def pack_mymolgen_params(params):
    """Pack all weights/biases into one [704, 256] f32 buffer.

    Call ONCE per parameter set (hoisted out of the jitted per-call path);
    done in numpy so it costs zero device ops."""
    fused = {
        'w1': params['w1'], 'b1': params['b1'],
        'p1': np.reshape(np.asarray(params['p1']), (1, -1)),
        'w2': params['w2'], 'b2': params['b2'],
        'p2': np.reshape(np.asarray(params['p2']), (1, -1)),
        # fc_mean | fc_logstd fused along the output axis (cols 0:50 = mu)
        'wml_g': np.concatenate([np.asarray(params['wm_g']), np.asarray(params['wl_g'])], axis=1),
        'wml_a': np.concatenate([np.asarray(params['wm_a']), np.asarray(params['wl_a'])], axis=1),
        'bml':   np.concatenate([np.asarray(params['bm']), np.asarray(params['bl'])], axis=1),
        # fc_decoder1 z-part row-duplicated so zfull=[mu | eps*exp(logstd)] is
        # consumed by one matmul without lane-splitting the fused ml block
        'wd1_zz': np.concatenate([np.asarray(params['wd1_z']), np.asarray(params['wd1_z'])], axis=0),
        'wd1_l': params['wd1_l'], 'bd1': params['bd1'],
        'wd2': params['wd2'], 'bd2': params['bd2'],
        'wo': params['wo'], 'bo': params['bo'],
    }
    buf = np.zeros((_PACK_ROWS, PACK_W), np.float32)
    for name, (r0, c0, h, wd) in _OFFS.items():
        arr = np.asarray(fused[name], np.float32)
        assert arr.shape == (h, wd), (name, arr.shape, (h, wd))
        buf[r0:r0 + h, c0:c0 + wd] = arr
    return jnp.asarray(buf)


def mymolgen_forward(x, A, mask, bmat, lens, eps, wpack, emb):
    """Fused mymolGen forward over B graph-batches.

    x:[B,N,30]  A:[B,N,N]  mask:[B,N,1]  bmat:[B,G,N]  lens:[B,G] int32
    eps:[B,G,50]  wpack: from pack_mymolgen_params  emb:[200,200]
    Returns (recon [B,G,200], mu [B,G,50], logstd [B,G,50])."""
    f32 = jnp.float32
    B, N, NF = x.shape
    G = bmat.shape[1]

    xf, Af, maskf, bmatf = (a.astype(f32) for a in (x, A, mask, bmat))

    # ------- per-call activation packing (2 data DMAs + resident weights) ----
    CN = C_A + N
    nbuf = jnp.zeros((B, N, CN), f32)
    nbuf = nbuf.at[..., 0:NF].set(xf)
    nbuf = nbuf.at[..., C_MASK:C_MASK + 1].set(maskf)
    # pool1's k depends only on (bmat, mask): precompute off the kernel chain
    nvalid = jnp.einsum('bgn,bnk->bgk', bmatf, maskf)                       # [B,G,1]
    k1_node = jnp.einsum('bgn,bgk->bnk', bmatf, jnp.ceil(RATIO * nvalid))   # [B,N,1]
    nbuf = nbuf.at[..., C_K1:C_K1 + 1].set(k1_node)
    nbuf = nbuf.at[..., C_BMT:C_BMT + G].set(jnp.swapaxes(bmatf, 1, 2))
    nbuf = nbuf.at[..., C_A:C_A + N].set(Af)

    CG = C_BM + N
    # Embedding lookup + relu in the wrapper: a G-row gather instead of an
    # in-kernel one-hot [G,200]x[200,200] matmul.
    len_emb = jnp.maximum(jnp.take(emb.astype(f32), lens, axis=0), 0.0)     # [B,G,200]
    gbuf = jnp.zeros((B, G, CG), f32)
    gbuf = gbuf.at[..., 0:EMB_DIM].set(len_emb)
    gbuf = gbuf.at[..., C_EPS + LAT:C_EPS + 2 * LAT].set(eps.astype(f32))   # [0 | eps]
    gbuf = gbuf.at[..., C_BM:C_BM + N].set(bmatf)

    def kernel(nb_ref, gb_ref, wp_ref, out_ref):
        def w(name):
            r0, c0, h, wd = _OFFS[name]
            return wp_ref[r0:r0 + h, c0:c0 + wd]      # static, sublane-aligned slice

        dot = lambda a, b: jnp.dot(a, b, preferred_element_type=f32)
        # contracting last dims of both operands (trans-B matmul on the MXU)
        dgen = lambda a, b: lax.dot_general(a, b, (((1,), (1,)), ((), ())),
                                            preferred_element_type=f32)

        X0    = nb_ref[:, 0:NF]                       # [N, 30]
        mask0 = nb_ref[:, C_MASK:C_MASK + 1]          # [N, 1]
        k1    = nb_ref[:, C_K1:C_K1 + 1]              # [N, 1] precomputed pool1 k
        BmT   = nb_ref[:, C_BMT:C_BMT + G]            # [N, G]
        Adj   = nb_ref[:, C_A:C_A + N]                # [N, N]
        len_e = gb_ref[:, 0:EMB_DIM]                  # [G, 200] relu(Embedding(len))
        eps_e = gb_ref[:, C_EPS:C_EPS + 2 * LAT]      # [G, 100] = [0 | eps]
        Bm    = gb_ref[:, C_BM:C_BM + N]              # [G, N]

        def gcn(Xin, mask_col, Wm, b_row):
            # D^-1/2 (A+I) D^-1/2 (X W) + b; dropped nodes excluded from both
            # aggregation and degree by folding mask into the matmul operands.
            deg = dot(Adj, mask_col) + 1.0                          # [N, 1]
            dinv = lax.rsqrt(deg)
            u = dinv * dot(Xin, Wm)
            return dinv * (dot(Adj, mask_col * u) + u) + b_row

        ii = lax.broadcasted_iota(jnp.int32, (N, N), 0)
        jj = lax.broadcasted_iota(jnp.int32, (N, N), 1)

        def topk_pool(Xin, mask_col, p_row, k_col=None):
            # score = tanh((x @ p)/||p||); keep top ceil(ratio*n_g) per graph;
            # kept features scaled by score, dropped nodes zeroed.
            inv_nrm = lax.rsqrt(jnp.sum(p_row * p_row, keepdims=True))      # [1, 1]
            s_col = jnp.tanh(dgen(Xin, p_row) * inv_nrm)                    # [N, 1]
            s_row = jnp.tanh(dgen(p_row, Xin) * inv_nrm)                    # [1, N]
            # node j beats node i (ties broken by index, diagonal excluded)
            beats = ((s_row > s_col) | ((s_row == s_col) & (jj < ii))) & (jj != ii)
            per_g = dot(jnp.where(beats, 1.0, 0.0), BmT * mask_col)         # [N, G]
            rank = jnp.sum(per_g * BmT, axis=1, keepdims=True)              # [N, 1]
            if k_col is None:
                k_col = jnp.ceil(RATIO * dot(BmT, dot(Bm, mask_col)))       # [N, 1]
            keep = jnp.where((mask_col > 0.0) & (rank < k_col), 1.0, 0.0)   # [N, 1]
            return Xin * s_col * keep, keep

        # ---------------- encoder ----------------
        x1 = jnp.maximum(gcn(X0, mask0, w('w1'), w('b1')), 0.0)     # relu(conv1)
        xp1, mask1 = topk_pool(x1, mask0, w('p1'), k1)              # pool1 (k prefetched)
        x2 = jnp.maximum(gcn(xp1, mask1, w('w2'), w('b2')), 0.0)    # relu(conv2)
        xp2, mask2 = topk_pool(x2, mask1, w('p2'))                  # pool2

        # global mean (exact divide) / max pool over kept nodes per graph
        cnt = dot(Bm, mask2)                                        # [G, 1]
        gap_ = dot(Bm, xp2) / cnt                                   # [G, 100]
        KM = BmT * mask2                                            # [N, G] kept membership
        ridx = lax.broadcasted_iota(jnp.int32, (G, EN_H2), 0)
        gmp_ = jnp.full((G, EN_H2), NEG, f32)
        for g in range(G):                                          # G static & tiny
            row = jnp.max(jnp.where(KM[:, g:g + 1] > 0.0, xp2, NEG),
                          axis=0, keepdims=True)                    # [1, 100]
            gmp_ = jnp.where(ridx == g, row, gmp_)

        # fused fc_mean|fc_logstd (reference ReLUs both): ml=[relu(mu)|relu(logstd)]
        ml = jnp.maximum(dot(gmp_, w('wml_g')) + dot(gap_, w('wml_a')) + w('bml'),
                         0.0)                                       # [G, 100]

        # reparameterize (training): zfull = [mu | eps*exp(logstd)], consumed by
        # the row-duplicated wd1_zz so z = mu + eps*exp(logstd) never needs a
        # lane-split of the fused ml block.
        cidx = lax.broadcasted_iota(jnp.int32, (1, 2 * LAT), 1)
        is_mu = (cidx < LAT).astype(f32)
        zfull = ml * is_mu + eps_e * jnp.exp(ml * (1.0 - is_mu))    # [G, 100]

        # ---------------- decoder ----------------
        h1 = jnp.maximum(dot(zfull, w('wd1_zz')) + dot(len_e, w('wd1_l'))
                         + w('bd1'), 0.0)                           # [G, 100]
        h2 = jnp.maximum(dot(h1, w('wd2')) + w('bd2'), 0.0) + len_e # [G, 200]
        recon = jnp.maximum(dot(h2, w('wo')) + w('bo'), 0.0)        # relu(fc_out)

        # single packed output block (one writeback DMA)
        out_ref[...] = jnp.zeros_like(out_ref)
        out_ref[:, C_RECON:C_RECON + MAX_SMILE] = recon
        out_ref[:, C_ML:C_ML + 2 * LAT] = ml

    out = pl.pallas_call(
        kernel,
        out_shape=jax.ShapeDtypeStruct((B, G, OUT_W), f32),
        grid=(B,),
        in_specs=[
            pl.BlockSpec((None, N, CN), lambda b: (b, 0, 0)),
            pl.BlockSpec((None, G, CG), lambda b: (b, 0, 0)),
            # same block index every step -> weights stay VMEM-resident across the grid
            pl.BlockSpec((_PACK_ROWS, PACK_W), lambda b: (0, 0)),
        ],
        out_specs=pl.BlockSpec((None, G, OUT_W), lambda b: (b, 0, 0)),
        compiler_params=pltpu.CompilerParams(dimension_semantics=("parallel",)),
    )(nbuf, gbuf, wpack)

    recon = out[..., C_RECON:C_RECON + MAX_SMILE]
    mu = out[..., C_ML:C_ML + LAT]
    logstd = out[..., C_ML + LAT:C_ML + 2 * LAT]
    return recon, mu, logstd


if __name__ == "__main__":
    key = jax.random.PRNGKey(0)
    keys = jax.random.split(key, 24)

    # B graph-batches per kernel call; each batch: two ring molecules (6 & 10 nodes)
    B = 2
    nodes_per_graph = [6, 10]
    N = sum(nodes_per_graph)
    G = len(nodes_per_graph)

    A1 = np.zeros((N, N), np.float32)
    batch_np = np.zeros((N,), np.int32)
    off = 0
    for g, n in enumerate(nodes_per_graph):
        batch_np[off:off + n] = g
        for i in range(n - 1):
            A1[off + i, off + i + 1] = 1.0
            A1[off + i + 1, off + i] = 1.0
        A1[off, off + n - 1] = 1.0
        A1[off + n - 1, off] = 1.0
        off += n
    bmat1 = (batch_np[None, :] == np.arange(G)[:, None]).astype(np.float32)

    A = jnp.asarray(np.broadcast_to(A1, (B, N, N)).copy())
    bmat = jnp.asarray(np.broadcast_to(bmat1, (B, G, N)).copy())
    mask = jnp.ones((B, N, 1), jnp.float32)
    x = jax.random.normal(keys[0], (B, N, IN_FEAT), jnp.float32)   # node features
    lens = jnp.asarray(np.array([[10, 25], [40, 7]], np.int32))     # SMILES lengths
    eps = jax.random.normal(keys[1], (B, G, LAT), jnp.float32)      # reparam noise (host-drawn)

    def init(k, shape, scale=0.1):
        return scale * jax.random.normal(k, shape, jnp.float32)

    # weights stored [in, out]; cat-consuming Linears pre-split along their input dim
    params = {
        'w1':   init(keys[2],  (30, 50)),   'b1':  init(keys[3],  (1, 50)),
        'p1':   init(keys[4],  (50, 1)),                                      # TopKPooling 1
        'w2':   init(keys[5],  (50, 100)),  'b2':  init(keys[6],  (1, 100)),
        'p2':   init(keys[7],  (100, 1)),                                     # TopKPooling 2
        'wm_g': init(keys[8],  (100, 50)),  'wm_a': init(keys[9],  (100, 50)),
        'bm':   init(keys[10], (1, 50)),                                      # fc_mean
        'wl_g': init(keys[11], (100, 50)),  'wl_a': init(keys[12], (100, 50)),
        'bl':   init(keys[13], (1, 50)),                                      # fc_logstd
        'emb':  init(keys[14], (200, 200)),                                   # fc_emd_len
        'wd1_z': init(keys[15], (50, 100)), 'wd1_l': init(keys[16], (200, 100)),
        'bd1':  init(keys[17], (1, 100)),                                     # fc_decoder1
        'wd2':  init(keys[18], (100, 200)), 'bd2': init(keys[19], (1, 200)),  # fc_decoder2
        'wo':   init(keys[20], (200, 200)), 'bo':  init(keys[21], (1, 200)),  # fc_out
    }

    wpack = pack_mymolgen_params(params)      # hoisted: packed ONCE, reused every call
    fwd = jax.jit(mymolgen_forward)
    recon, mu, logstd = jax.block_until_ready(
        fwd(x, A, mask, bmat, lens, eps, wpack, params['emb']))

    assert recon.shape == (B, G, 200)
    assert mu.shape == (B, G, 50)
    assert logstd.shape == (B, G, 50)
    assert bool(jnp.all(jnp.isfinite(recon)))
    assert bool(jnp.all(jnp.isfinite(mu)))
    assert bool(jnp.all(jnp.isfinite(logstd)))
    print("KERNEL_OK")
</pallas_src>

<mosaic_0001>
module attributes {stable_mosaic.version = 11 : i64} {
  func.func @kernel(%arg0: i32, %arg1: memref<1x16x400xf32, #tpu.memory_space<vmem>>, %arg2: memref<1x2x400xf32, #tpu.memory_space<vmem>>, %arg3: memref<704x256xf32, #tpu.memory_space<vmem>>, %arg4: memref<1x2x384xf32, #tpu.memory_space<vmem>>) attributes {dimension_semantics = [#tpu.dimension_semantics<parallel>], iteration_bounds = array<i64: 2>, scalar_prefetch = 0 : i64, scratch_operands = 0 : i64, tpu.core_type = #tpu.core_type<tc>, window_params = [{transform_indices = @transform_0, window_bounds = array<i64: 1, 16, 400>}, {transform_indices = @transform_1, window_bounds = array<i64: 1, 2, 400>}, {pipeline_mode = #tpu.pipeline_mode<synchronous>, transform_indices = @transform_2, window_bounds = array<i64: 704, 256>}, {transform_indices = @transform_3, window_bounds = array<i64: 1, 2, 384>}]} {
    %c0 = arith.constant 0 : index
    %c0_0 = arith.constant 0 : index
    %c0_1 = arith.constant 0 : index
    %0 = vector.load %arg1[%c0, %c0_0, %c0_1] : memref<1x16x400xf32, #tpu.memory_space<vmem>>, vector<1x16x30xf32>
    %1 = vector.shape_cast %0 : vector<1x16x30xf32> to vector<16x30xf32>
    %c0_2 = arith.constant 0 : index
    %c0_3 = arith.constant 0 : index
    %c128 = arith.constant 128 : index
    %2 = vector.load %arg1[%c0_2, %c0_3, %c128] : memref<1x16x400xf32, #tpu.memory_space<vmem>>, vector<1x16x1xf32>
    %3 = vector.shape_cast %2 : vector<1x16x1xf32> to vector<16x1xf32>
    %c0_4 = arith.constant 0 : index
    %c0_5 = arith.constant 0 : index
    %c129 = arith.constant 129 : index
    %4 = vector.load %arg1[%c0_4, %c0_5, %c129] : memref<1x16x400xf32, #tpu.memory_space<vmem>>, vector<1x16x1xf32>
    %5 = vector.shape_cast %4 : vector<1x16x1xf32> to vector<16x1xf32>
    %c0_6 = arith.constant 0 : index
    %c0_7 = arith.constant 0 : index
    %c256 = arith.constant 256 : index
    %6 = vector.load %arg1[%c0_6, %c0_7, %c256] : memref<1x16x400xf32, #tpu.memory_space<vmem>>, vector<1x16x2xf32>
    %7 = vector.shape_cast %6 : vector<1x16x2xf32> to vector<16x2xf32>
    %c0_8 = arith.constant 0 : index
    %c0_9 = arith.constant 0 : index
    %c384 = arith.constant 384 : index
    %8 = vector.load %arg1[%c0_8, %c0_9, %c384] : memref<1x16x400xf32, #tpu.memory_space<vmem>>, vector<1x16x16xf32>
    %9 = vector.shape_cast %8 : vector<1x16x16xf32> to vector<16x16xf32>
    %c0_10 = arith.constant 0 : index
    %c0_11 = arith.constant 0 : index
    %c0_12 = arith.constant 0 : index
    %10 = vector.load %arg2[%c0_10, %c0_11, %c0_12] : memref<1x2x400xf32, #tpu.memory_space<vmem>>, vector<1x2x200xf32>
    %11 = vector.shape_cast %10 : vector<1x2x200xf32> to vector<2x200xf32>
    %c0_13 = arith.constant 0 : index
    %c0_14 = arith.constant 0 : index
    %c256_15 = arith.constant 256 : index
    %12 = vector.load %arg2[%c0_13, %c0_14, %c256_15] : memref<1x2x400xf32, #tpu.memory_space<vmem>>, vector<1x2x100xf32>
    %13 = vector.shape_cast %12 : vector<1x2x100xf32> to vector<2x100xf32>
    %c0_16 = arith.constant 0 : index
    %c0_17 = arith.constant 0 : index
    %c384_18 = arith.constant 384 : index
    %14 = vector.load %arg2[%c0_16, %c0_17, %c384_18] : memref<1x2x400xf32, #tpu.memory_space<vmem>>, vector<1x2x16xf32>
    %15 = vector.shape_cast %14 : vector<1x2x16xf32> to vector<2x16xf32>
    %16 = tpu.iota {dimensions = array<i32: 0>} : vector<16x16xi32>
    %17 = tpu.iota {dimensions = array<i32: 1>} : vector<16x16xi32>
    %c0_19 = arith.constant 0 : index
    %c128_20 = arith.constant 128 : index
    %18 = vector.load %arg3[%c0_19, %c128_20] : memref<704x256xf32, #tpu.memory_space<vmem>>, vector<30x50xf32>
    %c56 = arith.constant 56 : index
    %c0_21 = arith.constant 0 : index
    %19 = vector.load %arg3[%c56, %c0_21] : memref<704x256xf32, #tpu.memory_space<vmem>>, vector<1x50xf32>
    %cst = arith.constant dense<0.000000e+00> : vector<16x1xf32>
    %20 = tpu.matmul %9, %3, %cst {dimension_numbers = #tpu.dot_dimension_numbers<[1], [0], [0], [1], [0, 0, 1, 1], [], []>} : vector<16x16xf32>, vector<16x1xf32>, vector<16x1xf32> -> vector<16x1xf32>
    %cst_22 = arith.constant 1.000000e+00 : f32
    %21 = vector.broadcast %cst_22 : f32 to vector<16x1xf32>
    %22 = arith.addf %20, %21 : vector<16x1xf32>
    %23 = math.rsqrt %22 : vector<16x1xf32>
    %cst_23 = arith.constant dense<0.000000e+00> : vector<16x50xf32>
    %24 = tpu.matmul %1, %18, %cst_23 {dimension_numbers = #tpu.dot_dimension_numbers<[1], [0], [0], [1], [0, 0, 1, 1], [], []>} : vector<16x30xf32>, vector<30x50xf32>, vector<16x50xf32> -> vector<16x50xf32>
    %25 = vector.broadcast %23 : vector<16x1xf32> to vector<16x50xf32>
    %26 = arith.mulf %25, %24 : vector<16x50xf32>
    %27 = vector.broadcast %3 : vector<16x1xf32> to vector<16x50xf32>
    %28 = arith.mulf %27, %26 : vector<16x50xf32>
    %cst_24 = arith.constant dense<0.000000e+00> : vector<16x50xf32>
    %29 = tpu.matmul %9, %28, %cst_24 {dimension_numbers = #tpu.dot_dimension_numbers<[1], [0], [0], [1], [0, 0, 1, 1], [], []>} : vector<16x16xf32>, vector<16x50xf32>, vector<16x50xf32> -> vector<16x50xf32>
    %30 = arith.addf %29, %26 : vector<16x50xf32>
    %31 = vector.broadcast %23 : vector<16x1xf32> to vector<16x50xf32>
    %32 = arith.mulf %31, %30 : vector<16x50xf32>
    %33 = vector.broadcast %19 : vector<1x50xf32> to vector<16x50xf32>
    %34 = arith.addf %32, %33 : vector<16x50xf32>
    %cst_25 = arith.constant 0.000000e+00 : f32
    %35 = vector.broadcast %cst_25 : f32 to vector<16x50xf32>
    %36 = arith.maximumf %34, %35 : vector<16x50xf32>
    %c64 = arith.constant 64 : index
    %c0_26 = arith.constant 0 : index
    %37 = vector.load %arg3[%c64, %c0_26] : memref<704x256xf32, #tpu.memory_space<vmem>>, vector<1x50xf32>
    %38 = arith.mulf %37, %37 : vector<1x50xf32>
    %39 = vector.shape_cast %38 : vector<1x50xf32> to vector<1x1x50xf32>
    %cst_27 = arith.constant dense<0.000000e+00> : vector<1xf32>
    %40 = vector.multi_reduction <add>, %39, %cst_27 [1, 2] : vector<1x1x50xf32> to vector<1xf32>
    %41 = vector.shape_cast %40 : vector<1xf32> to vector<1x1x1xf32>
    %42 = vector.extract %41[0, 0, 0] : f32 from vector<1x1x1xf32>
    %43 = vector.broadcast %42 : f32 to vector<1x1xf32>
    %44 = math.rsqrt %43 : vector<1x1xf32>
    %cst_28 = arith.constant dense<0.000000e+00> : vector<16x1xf32>
    %45 = tpu.matmul %36, %37, %cst_28 {dimension_numbers = #tpu.dot_dimension_numbers<[1], [1], [0], [0], [0, 0, 1, 0], [], []>} : vector<16x50xf32>, vector<1x50xf32>, vector<16x1xf32> -> vector<16x1xf32>
    %46 = vector.broadcast %44 : vector<1x1xf32> to vector<16x1xf32>
    %47 = arith.mulf %45, %46 : vector<16x1xf32>
    %48 = math.tanh %47 : vector<16x1xf32>
    %cst_29 = arith.constant dense<0.000000e+00> : vector<1x16xf32>
    %49 = tpu.matmul %37, %36, %cst_29 {dimension_numbers = #tpu.dot_dimension_numbers<[1], [1], [0], [0], [0, 0, 1, 0], [], []>} : vector<1x50xf32>, vector<16x50xf32>, vector<1x16xf32> -> vector<1x16xf32>
    %50 = vector.broadcast %44 : vector<1x1xf32> to vector<1x16xf32>
    %51 = arith.mulf %49, %50 : vector<1x16xf32>
    %52 = math.tanh %51 : vector<1x16xf32>
    %53 = vector.broadcast %52 : vector<1x16xf32> to vector<16x16xf32>
    %54 = vector.broadcast %48 : vector<16x1xf32> to vector<16x16xf32>
    %55 = arith.cmpf ogt, %53, %54 : vector<16x16xf32>
    %56 = vector.broadcast %52 : vector<1x16xf32> to vector<16x16xf32>
    %57 = vector.broadcast %48 : vector<16x1xf32> to vector<16x16xf32>
    %58 = arith.cmpf oeq, %56, %57 : vector<16x16xf32>
    %59 = arith.cmpi slt, %17, %16 : vector<16x16xi32>
    %60 = arith.andi %58, %59 : vector<16x16xi1>
    %61 = arith.ori %55, %60 : vector<16x16xi1>
    %62 = arith.cmpi ne, %17, %16 : vector<16x16xi32>
    %63 = arith.andi %61, %62 : vector<16x16xi1>
    %cst_30 = arith.constant 1.000000e+00 : f32
    %cst_31 = arith.constant 0.000000e+00 : f32
    %64 = vector.broadcast %cst_30 : f32 to vector<16x16xf32>
    %65 = vector.broadcast %cst_31 : f32 to vector<16x16xf32>
    %66 = arith.select %63, %64, %65 : vector<16x16xi1>, vector<16x16xf32>
    %67 = vector.broadcast %3 : vector<16x1xf32> to vector<16x2xf32>
    %68 = arith.mulf %7, %67 : vector<16x2xf32>
    %cst_32 = arith.constant dense<0.000000e+00> : vector<16x2xf32>
    %69 = tpu.matmul %66, %68, %cst_32 {dimension_numbers = #tpu.dot_dimension_numbers<[1], [0], [0], [1], [0, 0, 1, 1], [], []>} : vector<16x16xf32>, vector<16x2xf32>, vector<16x2xf32> -> vector<16x2xf32>
    %70 = arith.mulf %69, %7 : vector<16x2xf32>
    %cst_33 = arith.constant dense<0.000000e+00> : vector<16xf32>
    %71 = vector.multi_reduction <add>, %70, %cst_33 [1] : vector<16x2xf32> to vector<16xf32>
    %72 = vector.shape_cast %71 : vector<16xf32> to vector<16x1xf32>
    %cst_34 = arith.constant 0.000000e+00 : f32
    %73 = vector.broadcast %cst_34 : f32 to vector<16x1xf32>
    %74 = arith.cmpf ogt, %3, %73 : vector<16x1xf32>
    %75 = arith.cmpf olt, %72, %5 : vector<16x1xf32>
    %76 = arith.andi %74, %75 : vector<16x1xi1>
    %cst_35 = arith.constant 1.000000e+00 : f32
    %cst_36 = arith.constant 0.000000e+00 : f32
    %77 = vector.broadcast %cst_35 : f32 to vector<16x1xf32>
    %78 = vector.broadcast %cst_36 : f32 to vector<16x1xf32>
    %79 = arith.select %76, %77, %78 : vector<16x1xi1>, vector<16x1xf32>
    %80 = vector.broadcast %48 : vector<16x1xf32> to vector<16x50xf32>
    %81 = arith.mulf %36, %80 : vector<16x50xf32>
    %82 = vector.broadcast %79 : vector<16x1xf32> to vector<16x50xf32>
    %83 = arith.mulf %81, %82 : vector<16x50xf32>
    %c0_37 = arith.constant 0 : index
    %c0_38 = arith.constant 0 : index
    %84 = vector.load %arg3[%c0_37, %c0_38] : memref<704x256xf32, #tpu.memory_space<vmem>>, vector<50x100xf32>
    %c56_39 = arith.constant 56 : index
    %c128_40 = arith.constant 128 : index
    %85 = vector.load %arg3[%c56_39, %c128_40] : memref<704x256xf32, #tpu.memory_space<vmem>>, vector<1x100xf32>
    %cst_41 = arith.constant dense<0.000000e+00> : vector<16x1xf32>
    %86 = tpu.matmul %9, %79, %cst_41 {dimension_numbers = #tpu.dot_dimension_numbers<[1], [0], [0], [1], [0, 0, 1, 1], [], []>} : vector<16x16xf32>, vector<16x1xf32>, vector<16x1xf32> -> vector<16x1xf32>
    %cst_42 = arith.constant 1.000000e+00 : f32
    %87 = vector.broadcast %cst_42 : f32 to vector<16x1xf32>
    %88 = arith.addf %86, %87 : vector<16x1xf32>
    %89 = math.rsqrt %88 : vector<16x1xf32>
    %cst_43 = arith.constant dense<0.000000e+00> : vector<16x100xf32>
    %90 = tpu.matmul %83, %84, %cst_43 {dimension_numbers = #tpu.dot_dimension_numbers<[1], [0], [0], [1], [0, 0, 1, 1], [], []>} : vector<16x50xf32>, vector<50x100xf32>, vector<16x100xf32> -> vector<16x100xf32>
    %91 = vector.broadcast %89 : vector<16x1xf32> to vector<16x100xf32>
    %92 = arith.mulf %91, %90 : vector<16x100xf32>
    %93 = vector.broadcast %79 : vector<16x1xf32> to vector<16x100xf32>
    %94 = arith.mulf %93, %92 : vector<16x100xf32>
    %cst_44 = arith.constant dense<0.000000e+00> : vector<16x100xf32>
    %95 = tpu.matmul %9, %94, %cst_44 {dimension_numbers = #tpu.dot_dimension_numbers<[1], [0], [0], [1], [0, 0, 1, 1], [], []>} : vector<16x16xf32>, vector<16x100xf32>, vector<16x100xf32> -> vector<16x100xf32>
    %96 = arith.addf %95, %92 : vector<16x100xf32>
    %97 = vector.broadcast %89 : vector<16x1xf32> to vector<16x100xf32>
    %98 = arith.mulf %97, %96 : vector<16x100xf32>
    %99 = vector.broadcast %85 : vector<1x100xf32> to vector<16x100xf32>
    %100 = arith.addf %98, %99 : vector<16x100xf32>
    %cst_45 = arith.constant 0.000000e+00 : f32
    %101 = vector.broadcast %cst_45 : f32 to vector<16x100xf32>
    %102 = arith.maximumf %100, %101 : vector<16x100xf32>
    %c64_46 = arith.constant 64 : index
    %c128_47 = arith.constant 128 : index
    %103 = vector.load %arg3[%c64_46, %c128_47] : memref<704x256xf32, #tpu.memory_space<vmem>>, vector<1x100xf32>
    %104 = arith.mulf %103, %103 : vector<1x100xf32>
    %105 = vector.shape_cast %104 : vector<1x100xf32> to vector<1x1x100xf32>
    %cst_48 = arith.constant dense<0.000000e+00> : vector<1xf32>
    %106 = vector.multi_reduction <add>, %105, %cst_48 [1, 2] : vector<1x1x100xf32> to vector<1xf32>
    %107 = vector.shape_cast %106 : vector<1xf32> to vector<1x1x1xf32>
    %108 = vector.extract %107[0, 0, 0] : f32 from vector<1x1x1xf32>
    %109 = vector.broadcast %108 : f32 to vector<1x1xf32>
    %110 = math.rsqrt %109 : vector<1x1xf32>
    %cst_49 = arith.constant dense<0.000000e+00> : vector<16x1xf32>
    %111 = tpu.matmul %102, %103, %cst_49 {dimension_numbers = #tpu.dot_dimension_numbers<[1], [1], [0], [0], [0, 0, 1, 0], [], []>} : vector<16x100xf32>, vector<1x100xf32>, vector<16x1xf32> -> vector<16x1xf32>
    %112 = vector.broadcast %110 : vector<1x1xf32> to vector<16x1xf32>
    %113 = arith.mulf %111, %112 : vector<16x1xf32>
    %114 = math.tanh %113 : vector<16x1xf32>
    %cst_50 = arith.constant dense<0.000000e+00> : vector<1x16xf32>
    %115 = tpu.matmul %103, %102, %cst_50 {dimension_numbers = #tpu.dot_dimension_numbers<[1], [1], [0], [0], [0, 0, 1, 0], [], []>} : vector<1x100xf32>, vector<16x100xf32>, vector<1x16xf32> -> vector<1x16xf32>
    %116 = vector.broadcast %110 : vector<1x1xf32> to vector<1x16xf32>
    %117 = arith.mulf %115, %116 : vector<1x16xf32>
    %118 = math.tanh %117 : vector<1x16xf32>
    %119 = vector.broadcast %118 : vector<1x16xf32> to vector<16x16xf32>
    %120 = vector.broadcast %114 : vector<16x1xf32> to vector<16x16xf32>
    %121 = arith.cmpf ogt, %119, %120 : vector<16x16xf32>
    %122 = vector.broadcast %118 : vector<1x16xf32> to vector<16x16xf32>
    %123 = vector.broadcast %114 : vector<16x1xf32> to vector<16x16xf32>
    %124 = arith.cmpf oeq, %122, %123 : vector<16x16xf32>
    %125 = arith.cmpi slt, %17, %16 : vector<16x16xi32>
    %126 = arith.andi %124, %125 : vector<16x16xi1>
    %127 = arith.ori %121, %126 : vector<16x16xi1>
    %128 = arith.cmpi ne, %17, %16 : vector<16x16xi32>
    %129 = arith.andi %127, %128 : vector<16x16xi1>
    %cst_51 = arith.constant 1.000000e+00 : f32
    %cst_52 = arith.constant 0.000000e+00 : f32
    %130 = vector.broadcast %cst_51 : f32 to vector<16x16xf32>
    %131 = vector.broadcast %cst_52 : f32 to vector<16x16xf32>
    %132 = arith.select %129, %130, %131 : vector<16x16xi1>, vector<16x16xf32>
    %133 = vector.broadcast %79 : vector<16x1xf32> to vector<16x2xf32>
    %134 = arith.mulf %7, %133 : vector<16x2xf32>
    %cst_53 = arith.constant dense<0.000000e+00> : vector<16x2xf32>
    %135 = tpu.matmul %132, %134, %cst_53 {dimension_numbers = #tpu.dot_dimension_numbers<[1], [0], [0], [1], [0, 0, 1, 1], [], []>} : vector<16x16xf32>, vector<16x2xf32>, vector<16x2xf32> -> vector<16x2xf32>
    %136 = arith.mulf %135, %7 : vector<16x2xf32>
    %cst_54 = arith.constant dense<0.000000e+00> : vector<16xf32>
    %137 = vector.multi_reduction <add>, %136, %cst_54 [1] : vector<16x2xf32> to vector<16xf32>
    %138 = vector.shape_cast %137 : vector<16xf32> to vector<16x1xf32>
    %cst_55 = arith.constant dense<0.000000e+00> : vector<2x1xf32>
    %139 = tpu.matmul %15, %79, %cst_55 {dimension_numbers = #tpu.dot_dimension_numbers<[1], [0], [0], [1], [0, 0, 1, 1], [], []>} : vector<2x16xf32>, vector<16x1xf32>, vector<2x1xf32> -> vector<2x1xf32>
    %cst_56 = arith.constant dense<0.000000e+00> : vector<16x1xf32>
    %140 = tpu.matmul %7, %139, %cst_56 {dimension_numbers = #tpu.dot_dimension_numbers<[1], [0], [0], [1], [0, 0, 1, 1], [], []>} : vector<16x2xf32>, vector<2x1xf32>, vector<16x1xf32> -> vector<16x1xf32>
    %cst_57 = arith.constant 8.000000e-01 : f32
    %141 = vector.broadcast %cst_57 : f32 to vector<16x1xf32>
    %142 = arith.mulf %141, %140 : vector<16x1xf32>
    %143 = math.ceil %142 : vector<16x1xf32>
    %cst_58 = arith.constant 0.000000e+00 : f32
    %144 = vector.broadcast %cst_58 : f32 to vector<16x1xf32>
    %145 = arith.cmpf ogt, %79, %144 : vector<16x1xf32>
    %146 = arith.cmpf olt, %138, %143 : vector<16x1xf32>
    %147 = arith.andi %145, %146 : vector<16x1xi1>
    %cst_59 = arith.constant 1.000000e+00 : f32
    %cst_60 = arith.constant 0.000000e+00 : f32
    %148 = vector.broadcast %cst_59 : f32 to vector<16x1xf32>
    %149 = vector.broadcast %cst_60 : f32 to vector<16x1xf32>
    %150 = arith.select %147, %148, %149 : vector<16x1xi1>, vector<16x1xf32>
    %151 = vector.broadcast %114 : vector<16x1xf32> to vector<16x100xf32>
    %152 = arith.mulf %102, %151 : vector<16x100xf32>
    %153 = vector.broadcast %150 : vector<16x1xf32> to vector<16x100xf32>
    %154 = arith.mulf %152, %153 : vector<16x100xf32>
    %cst_61 = arith.constant dense<0.000000e+00> : vector<2x1xf32>
    %155 = tpu.matmul %15, %150, %cst_61 {dimension_numbers = #tpu.dot_dimension_numbers<[1], [0], [0], [1], [0, 0, 1, 1], [], []>} : vector<2x16xf32>, vector<16x1xf32>, vector<2x1xf32> -> vector<2x1xf32>
    %cst_62 = arith.constant dense<0.000000e+00> : vector<2x100xf32>
    %156 = tpu.matmul %15, %154, %cst_62 {dimension_numbers = #tpu.dot_dimension_numbers<[1], [0], [0], [1], [0, 0, 1, 1], [], []>} : vector<2x16xf32>, vector<16x100xf32>, vector<2x100xf32> -> vector<2x100xf32>
    %157 = vector.broadcast %155 : vector<2x1xf32> to vector<2x100xf32>
    %158 = arith.divf %156, %157 : vector<2x100xf32>
    %159 = vector.broadcast %150 : vector<16x1xf32> to vector<16x2xf32>
    %160 = arith.mulf %7, %159 : vector<16x2xf32>
    %161 = tpu.iota {dimensions = array<i32: 0>} : vector<2x100xi32>
    %cst_63 = arith.constant -1.000000e+30 : f32
    %162 = vector.broadcast %cst_63 : f32 to vector<2x100xf32>
    %163 = vector.extract_strided_slice %160 {offsets = [0, 0], sizes = [16, 1], strides = [1, 1]} : vector<16x2xf32> to vector<16x1xf32>
    %cst_64 = arith.constant 0.000000e+00 : f32
    %164 = vector.broadcast %cst_64 : f32 to vector<16x1xf32>
    %165 = arith.cmpf ogt, %163, %164 : vector<16x1xf32>
    %cst_65 = arith.constant -1.000000e+30 : f32
    %166 = vector.shape_cast %165 : vector<16x1xi1> to vector<16x1xi1>
    %167 = vector.broadcast %166 : vector<16x1xi1> to vector<16x100xi1>
    %168 = vector.broadcast %cst_65 : f32 to vector<16x100xf32>
    %169 = arith.select %167, %154, %168 : vector<16x100xi1>, vector<16x100xf32>
    %cst_66 = arith.constant dense<0xFF800000> : vector<100xf32>
    %170 = vector.multi_reduction <maximumf>, %169, %cst_66 [0] : vector<16x100xf32> to vector<100xf32>
    %171 = vector.shape_cast %170 : vector<100xf32> to vector<1x100xf32>
    %c0_i32 = arith.constant 0 : i32
    %172 = vector.broadcast %c0_i32 : i32 to vector<2x100xi32>
    %173 = arith.cmpi eq, %161, %172 : vector<2x100xi32>
    %174 = vector.shape_cast %171 : vector<1x100xf32> to vector<1x100xf32>
    %175 = vector.broadcast %174 : vector<1x100xf32> to vector<2x100xf32>
    %176 = arith.select %173, %175, %162 : vector<2x100xi1>, vector<2x100xf32>
    %177 = vector.extract_strided_slice %160 {offsets = [0, 1], sizes = [16, 1], strides = [1, 1]} : vector<16x2xf32> to vector<16x1xf32>
    %cst_67 = arith.constant 0.000000e+00 : f32
    %178 = vector.broadcast %cst_67 : f32 to vector<16x1xf32>
    %179 = arith.cmpf ogt, %177, %178 : vector<16x1xf32>
    %cst_68 = arith.constant -1.000000e+30 : f32
    %180 = vector.shape_cast %179 : vector<16x1xi1> to vector<16x1xi1>
    %181 = vector.broadcast %180 : vector<16x1xi1> to vector<16x100xi1>
    %182 = vector.broadcast %cst_68 : f32 to vector<16x100xf32>
    %183 = arith.select %181, %154, %182 : vector<16x100xi1>, vector<16x100xf32>
    %cst_69 = arith.constant dense<0xFF800000> : vector<100xf32>
    %184 = vector.multi_reduction <maximumf>, %183, %cst_69 [0] : vector<16x100xf32> to vector<100xf32>
    %185 = vector.shape_cast %184 : vector<100xf32> to vector<1x100xf32>
    %c1_i32 = arith.constant 1 : i32
    %186 = vector.broadcast %c1_i32 : i32 to vector<2x100xi32>
    %187 = arith.cmpi eq, %161, %186 : vector<2x100xi32>
    %188 = vector.shape_cast %185 : vector<1x100xf32> to vector<1x100xf32>
    %189 = vector.broadcast %188 : vector<1x100xf32> to vector<2x100xf32>
    %190 = arith.select %187, %189, %176 : vector<2x100xi1>, vector<2x100xf32>
    %c72 = arith.constant 72 : index
    %c0_70 = arith.constant 0 : index
    %191 = vector.load %arg3[%c72, %c0_70] : memref<704x256xf32, #tpu.memory_space<vmem>>, vector<100x100xf32>
    %cst_71 = arith.constant dense<0.000000e+00> : vector<2x100xf32>
    %192 = tpu.matmul %190, %191, %cst_71 {dimension_numbers = #tpu.dot_dimension_numbers<[1], [0], [0], [1], [0, 0, 1, 1], [], []>} : vector<2x100xf32>, vector<100x100xf32>, vector<2x100xf32> -> vector<2x100xf32>
    %c72_72 = arith.constant 72 : index
    %c128_73 = arith.constant 128 : index
    %193 = vector.load %arg3[%c72_72, %c128_73] : memref<704x256xf32, #tpu.memory_space<vmem>>, vector<100x100xf32>
    %cst_74 = arith.constant dense<0.000000e+00> : vector<2x100xf32>
    %194 = tpu.matmul %158, %193, %cst_74 {dimension_numbers = #tpu.dot_dimension_numbers<[1], [0], [0], [1], [0, 0, 1, 1], [], []>} : vector<2x100xf32>, vector<100x100xf32>, vector<2x100xf32> -> vector<2x100xf32>
    %195 = arith.addf %192, %194 : vector<2x100xf32>
    %c176 = arith.constant 176 : index
    %c0_75 = arith.constant 0 : index
    %196 = vector.load %arg3[%c176, %c0_75] : memref<704x256xf32, #tpu.memory_space<vmem>>, vector<1x100xf32>
    %197 = vector.broadcast %196 : vector<1x100xf32> to vector<2x100xf32>
    %198 = arith.addf %195, %197 : vector<2x100xf32>
    %cst_76 = arith.constant 0.000000e+00 : f32
    %199 = vector.broadcast %cst_76 : f32 to vector<2x100xf32>
    %200 = arith.maximumf %198, %199 : vector<2x100xf32>
    %201 = tpu.iota {dimensions = array<i32: 1>} : vector<1x100xi32>
    %c50_i32 = arith.constant 50 : i32
    %202 = vector.broadcast %c50_i32 : i32 to vector<1x100xi32>
    %203 = arith.cmpi slt, %201, %202 : vector<1x100xi32>
    %204 = arith.extui %203 : vector<1x100xi1> to vector<1x100xi32>
    %205 = arith.sitofp %204 : vector<1x100xi32> to vector<1x100xf32>
    %206 = vector.broadcast %205 : vector<1x100xf32> to vector<2x100xf32>
    %207 = arith.mulf %200, %206 : vector<2x100xf32>
    %cst_77 = arith.constant 1.000000e+00 : f32
    %208 = vector.broadcast %cst_77 : f32 to vector<1x100xf32>
    %209 = arith.subf %208, %205 : vector<1x100xf32>
    %210 = vector.broadcast %209 : vector<1x100xf32> to vector<2x100xf32>
    %211 = arith.mulf %200, %210 : vector<2x100xf32>
    %212 = math.exp %211 : vector<2x100xf32>
    %213 = arith.mulf %13, %212 : vector<2x100xf32>
    %214 = arith.addf %207, %213 : vector<2x100xf32>
    %c184 = arith.constant 184 : index
    %c128_78 = arith.constant 128 : index
    %215 = vector.load %arg3[%c184, %c128_78] : memref<704x256xf32, #tpu.memory_space<vmem>>, vector<100x100xf32>
    %cst_79 = arith.constant dense<0.000000e+00> : vector<2x100xf32>
    %216 = tpu.matmul %214, %215, %cst_79 {dimension_numbers = #tpu.dot_dimension_numbers<[1], [0], [0], [1], [0, 0, 1, 1], [], []>} : vector<2x100xf32>, vector<100x100xf32>, vector<2x100xf32> -> vector<2x100xf32>
    %c184_80 = arith.constant 184 : index
    %c0_81 = arith.constant 0 : index
    %217 = vector.load %arg3[%c184_80, %c0_81] : memref<704x256xf32, #tpu.memory_space<vmem>>, vector<200x100xf32>
    %cst_82 = arith.constant dense<0.000000e+00> : vector<2x100xf32>
    %218 = tpu.matmul %11, %217, %cst_82 {dimension_numbers = #tpu.dot_dimension_numbers<[1], [0], [0], [1], [0, 0, 1, 1], [], []>} : vector<2x200xf32>, vector<200x100xf32>, vector<2x100xf32> -> vector<2x100xf32>
    %219 = arith.addf %216, %218 : vector<2x100xf32>
    %c176_83 = arith.constant 176 : index
    %c128_84 = arith.constant 128 : index
    %220 = vector.load %arg3[%c176_83, %c128_84] : memref<704x256xf32, #tpu.memory_space<vmem>>, vector<1x100xf32>
    %221 = vector.broadcast %220 : vector<1x100xf32> to vector<2x100xf32>
    %222 = arith.addf %219, %221 : vector<2x100xf32>
    %cst_85 = arith.constant 0.000000e+00 : f32
    %223 = vector.broadcast %cst_85 : f32 to vector<2x100xf32>
    %224 = arith.maximumf %222, %223 : vector<2x100xf32>
    %c384_86 = arith.constant 384 : index
    %c0_87 = arith.constant 0 : index
    %225 = vector.load %arg3[%c384_86, %c0_87] : memref<704x256xf32, #tpu.memory_space<vmem>>, vector<100x200xf32>
    %cst_88 = arith.constant dense<0.000000e+00> : vector<2x200xf32>
    %226 = tpu.matmul %224, %225, %cst_88 {dimension_numbers = #tpu.dot_dimension_numbers<[1], [0], [0], [1], [0, 0, 1, 1], [], []>} : vector<2x100xf32>, vector<100x200xf32>, vector<2x200xf32> -> vector<2x200xf32>
    %c488 = arith.constant 488 : index
    %c0_89 = arith.constant 0 : index
    %227 = vector.load %arg3[%c488, %c0_89] : memref<704x256xf32, #tpu.memory_space<vmem>>, vector<1x200xf32>
    %228 = vector.broadcast %227 : vector<1x200xf32> to vector<2x200xf32>
    %229 = arith.addf %226, %228 : vector<2x200xf32>
    %cst_90 = arith.constant 0.000000e+00 : f32
    %230 = vector.broadcast %cst_90 : f32 to vector<2x200xf32>
    %231 = arith.maximumf %229, %230 : vector<2x200xf32>
    %232 = arith.addf %231, %11 : vector<2x200xf32>
    %c496 = arith.constant 496 : index
    %c0_91 = arith.constant 0 : index
    %233 = vector.load %arg3[%c496, %c0_91] : memref<704x256xf32, #tpu.memory_space<vmem>>, vector<200x200xf32>
    %cst_92 = arith.constant dense<0.000000e+00> : vector<2x200xf32>
    %234 = tpu.matmul %232, %233, %cst_92 {dimension_numbers = #tpu.dot_dimension_numbers<[1], [0], [0], [1], [0, 0, 1, 1], [], []>} : vector<2x200xf32>, vector<200x200xf32>, vector<2x200xf32> -> vector<2x200xf32>
    %c696 = arith.constant 696 : index
    %c0_93 = arith.constant 0 : index
    %235 = vector.load %arg3[%c696, %c0_93] : memref<704x256xf32, #tpu.memory_space<vmem>>, vector<1x200xf32>
    %236 = vector.broadcast %235 : vector<1x200xf32> to vector<2x200xf32>
    %237 = arith.addf %234, %236 : vector<2x200xf32>
    %cst_94 = arith.constant 0.000000e+00 : f32
    %238 = vector.broadcast %cst_94 : f32 to vector<2x200xf32>
    %239 = arith.maximumf %237, %238 : vector<2x200xf32>
    %cst_95 = arith.constant 0.000000e+00 : f32
    %240 = vector.broadcast %cst_95 : f32 to vector<2x384xf32>
    %c0_96 = arith.constant 0 : index
    %c0_97 = arith.constant 0 : index
    %c0_98 = arith.constant 0 : index
    %241 = vector.load %arg4[%c0_96, %c0_97, %c0_98] : memref<1x2x384xf32, #tpu.memory_space<vmem>>, vector<1x2x384xf32>
    %242 = vector.shape_cast %241 : vector<1x2x384xf32> to vector<2x384xf32>
    %243 = vector.shape_cast %240 : vector<2x384xf32> to vector<1x2x384xf32>
    tpu.vector_store %arg4[%c0_96, %c0_97, %c0_98], %243 {strides = array<i32>} : memref<1x2x384xf32, #tpu.memory_space<vmem>>, vector<1x2x384xf32>,
    %c0_99 = arith.constant 0 : index
    %c0_100 = arith.constant 0 : index
    %c0_101 = arith.constant 0 : index
    %244 = vector.load %arg4[%c0_99, %c0_100, %c0_101] : memref<1x2x384xf32, #tpu.memory_space<vmem>>, vector<1x2x200xf32>
    %245 = vector.shape_cast %244 : vector<1x2x200xf32> to vector<2x200xf32>
    %246 = vector.shape_cast %239 : vector<2x200xf32> to vector<1x2x200xf32>
    tpu.vector_store %arg4[%c0_99, %c0_100, %c0_101], %246 {strides = array<i32>} : memref<1x2x384xf32, #tpu.memory_space<vmem>>, vector<1x2x200xf32>,
    %c0_102 = arith.constant 0 : index
    %c0_103 = arith.constant 0 : index
    %c256_104 = arith.constant 256 : index
    %247 = vector.load %arg4[%c0_102, %c0_103, %c256_104] : memref<1x2x384xf32, #tpu.memory_space<vmem>>, vector<1x2x100xf32>
    %248 = vector.shape_cast %247 : vector<1x2x100xf32> to vector<2x100xf32>
    %249 = vector.shape_cast %200 : vector<2x100xf32> to vector<1x2x100xf32>
    tpu.vector_store %arg4[%c0_102, %c0_103, %c256_104], %249 {strides = array<i32>} : memref<1x2x384xf32, #tpu.memory_space<vmem>>, vector<1x2x100xf32>,
    return
  }
  func.func @transform_0(%arg0: i32) -> (i32, i32, i32) {
    %c0_i32 = arith.constant 0 : i32
    %c0_i32_0 = arith.constant 0 : i32
    %c0_i32_1 = arith.constant 0 : i32
    return %arg0, %c0_i32, %c0_i32_0 : i32, i32, i32
  }
  func.func @transform_1(%arg0: i32) -> (i32, i32, i32) {
    %c0_i32 = arith.constant 0 : i32
    %c0_i32_0 = arith.constant 0 : i32
    %c0_i32_1 = arith.constant 0 : i32
    return %arg0, %c0_i32, %c0_i32_0 : i32, i32, i32
  }
  func.func @transform_2(%arg0: i32) -> (i32, i32) {
    %c0_i32 = arith.constant 0 : i32
    %c0_i32_0 = arith.constant 0 : i32
    %c0_i32_1 = arith.constant 0 : i32
    return %c0_i32, %c0_i32_0 : i32, i32
  }
  func.func @transform_3(%arg0: i32) -> (i32, i32, i32) {
    %c0_i32 = arith.constant 0 : i32
    %c0_i32_0 = arith.constant 0 : i32
    %c0_i32_1 = arith.constant 0 : i32
    return %arg0, %c0_i32, %c0_i32_0 : i32, i32, i32
  }
}

</mosaic_0001>

<llo_original>
// kernel: mymolgen_forward.1
$region0: #{mymolgen_forward.1}
  #allocation0 [shape = 'u32[]', space=smem, size = 0x4, offset = 0x4, fixed_abs, tag = 'smem constant byte address 0x4 - core index']
  #allocation1 [shape = 'u32[72,128]{1,0:T(1,128)}', space=vmem, size = 0x9000, scoped, tag = 'internal scratch']
  %s0 = inlined_call_operand.vmem [shape: f32[2,16,400], index: 0, kind: input, shape index: {}]
  %s1 = inlined_call_operand.vmem [shape: f32[2,2,400], index: 1, kind: input, shape index: {}]
  %s2 = inlined_call_operand.hbm [shape: f32[704,256], index: 2, kind: input, shape index: {}]
  %s3 = inlined_call_operand.vmem [shape: f32[2,2,384], index: 3, kind: output, shape index: {}]
  %s4 = sld [smem:[#allocation0]]
  $region49: #{mymolgen_forward.1} parent=0
    _
  %s6 = ssub.s32 1, %s4
  %s7 = scalar_select 0, %s6, %s4
  $region1: #{mymolgen_forward.1} parent=0
    #allocation2 [shape = 'u8[720896]{0}', space=vmem, size = 0xb0000, scoped, tag = 'input window, operand 2, single buffered']
    #allocation3 [shape = 's32[2]{0}', space=sflag, size = 0x8, scoped, tag = 'scoped memory for mymolgen_forward.1']
    %8 = vsyncpa [#allocation3], 0
    loop: start=0, step=1, limit=4
    $region2: #{mymolgen_forward.1} parent=1 // loop_pre_header
      _
    $region3: #{mymolgen_forward.1} parent=1 // loop_header
      %s10 = sphi 0, %s14
      %p11 = scmp.ge.s32.totalorder %s10, 4
      %s20 = sphi 0, %s22
      %s23 = sphi 0, %s20
      %s24 = sphi 0, %s23
      %s40 = sphi 0, %s24
      %s46 = sphi 0, %s48
      %s49 = sphi 0, %s46
      %s50 = sphi 0, %s49
      %s66 = sphi 0, %s50
      %s70 = sphi 0, %s70
      %s72 = sphi 0, %s70
      %s73 = sphi 0, %s72
      %s87 = sphi 0, %s73
      %s93 = sphi 0, %s95
      %s96 = sphi 0, %s93
      %s97 = sphi 0, %s96
      %s113 = sphi 0, %s97
    $region4: #{mymolgen_forward.1} parent=1 // loop_header_branch
      %13 = sbr.rel (%p11) target = $region8
    $region5: #{mymolgen_forward.1} parent=1 // loop_body
      %s15 = ssub.s32 %s10, 1
      %s16 = ssub.s32 %s10, 2
      %s17 = sadd.s32 %s10, 1
      %s18 = ssub.s32 %s10, %s17
      %p19 = scmp.eq.s32.totalorder %s18, 0
      %s21 = sadd.s32 %s20, 1
      %s22 = scalar_select %p19, %s20, %s21
      %p25 = pneg %p19
      %p26 = scmp.eq.s32.totalorder %s10, 1
      %p27 = por %p25, %p26
      %p28 = scmp.ne.s32.totalorder %s20, %s23
      %p29 = scmp.eq.s32.totalorder %s10, 0
      %p30 = por %p28, %p29
      %p31 = scmp.ne.s32.totalorder %s20, %s23
      %p32 = scmp.eq.s32.totalorder %s15, 1
      %p33 = por %p31, %p32
      %p34 = scmp.ne.s32.totalorder %s23, %s24
      %p35 = scmp.eq.s32.totalorder %s15, 0
      %p36 = por %p34, %p35
      %p37 = scmp.ne.s32.totalorder %s23, %s24
      %p38 = scmp.eq.s32.totalorder %s16, 1
      %p39 = por %p37, %p38
      %p41 = scmp.ne.s32.totalorder %s24, %s40
      %p42 = scmp.eq.s32.totalorder %s16, 0
      %p43 = por %p41, %p42
      %s44 = ssub.s32 %s10, %s17
      %p45 = scmp.eq.s32.totalorder %s44, 0
      %s47 = sadd.s32 %s46, 1
      %s48 = scalar_select %p45, %s46, %s47
      %p51 = pneg %p45
      %p52 = scmp.eq.s32.totalorder %s10, 1
      %p53 = por %p51, %p52
      %p54 = scmp.ne.s32.totalorder %s46, %s49
      %p55 = scmp.eq.s32.totalorder %s10, 0
      %p56 = por %p54, %p55
      %p57 = scmp.ne.s32.totalorder %s46, %s49
      %p58 = scmp.eq.s32.totalorder %s15, 1
      %p59 = por %p57, %p58
      %p60 = scmp.ne.s32.totalorder %s49, %s50
      %p61 = scmp.eq.s32.totalorder %s15, 0
      %p62 = por %p60, %p61
      %p63 = scmp.ne.s32.totalorder %s49, %s50
      %p64 = scmp.eq.s32.totalorder %s16, 1
      %p65 = por %p63, %p64
      %p67 = scmp.ne.s32.totalorder %s50, %s66
      %p68 = scmp.eq.s32.totalorder %s16, 0
      %p69 = por %p67, %p68
      %s71 = sadd.s32 %s70, 1
      %p74 = scmp.eq.s32.totalorder %s10, 1
      %p75 = scmp.ne.s32.totalorder %s70, %s72
      %p76 = scmp.eq.s32.totalorder %s10, 0
      %p77 = por %p75, %p76
      %p78 = scmp.ne.s32.totalorder %s70, %s72
      %p79 = scmp.eq.s32.totalorder %s15, 1
      %p80 = por %p78, %p79
      %p81 = scmp.ne.s32.totalorder %s72, %s73
      %p82 = scmp.eq.s32.totalorder %s15, 0
      %p83 = por %p81, %p82
      %p84 = scmp.ne.s32.totalorder %s72, %s73
      %p85 = scmp.eq.s32.totalorder %s16, 1
      %p86 = por %p84, %p85
      %p88 = scmp.ne.s32.totalorder %s73, %s87
      %p89 = scmp.eq.s32.totalorder %s16, 0
      %p90 = por %p88, %p89
      %s91 = ssub.s32 %s10, %s17
      %p92 = scmp.eq.s32.totalorder %s91, 0
      %s94 = sadd.s32 %s93, 1
      %s95 = scalar_select %p92, %s93, %s94
      %p98 = pneg %p92
      %p99 = scmp.eq.s32.totalorder %s10, 1
      %p100 = por %p98, %p99
      %p101 = scmp.ne.s32.totalorder %s93, %s96
      %p102 = scmp.eq.s32.totalorder %s10, 0
      %p103 = por %p101, %p102
      %p104 = scmp.ne.s32.totalorder %s93, %s96
      %p105 = scmp.eq.s32.totalorder %s15, 1
      %p106 = por %p104, %p105
      %p107 = scmp.ne.s32.totalorder %s96, %s97
      %p108 = scmp.eq.s32.totalorder %s15, 0
      %p109 = por %p107, %p108
      %p110 = scmp.ne.s32.totalorder %s96, %s97
      %p111 = scmp.eq.s32.totalorder %s16, 1
      %p112 = por %p110, %p111
      %p114 = scmp.ne.s32.totalorder %s97, %s113
      %p115 = scmp.eq.s32.totalorder %s16, 0
      %p116 = por %p114, %p115
      %p117 = scmp.le.s32.totalorder 1, %s10
      %p118 = scmp.lt.s32.totalorder %s10, 3
      %p119 = pnand %p117, %p118
      %p120 = pneg %p119
      // Predicated region
      $region9: #{mymolgen_forward.1} parent=5 // pred_check
        _
      $region10: #{mymolgen_forward.1} parent=5 // pred_check_branch
        %122 = sbr.rel (%p119) target = $region12
      $region11: #{mymolgen_forward.1} parent=5 // pred_region
        %s123 = ssub.s32 %s10, 1
        // Predicated region
        $region13: #{mymolgen_forward.1} parent=11 // pred_check
          %p124 = pneg %p83
        $region14: #{mymolgen_forward.1} parent=11 // pred_check_branch
          %126 = sbr.rel (%p124) target = $region16
        $region15: #{mymolgen_forward.1} parent=11 // pred_region
          %128 = vsyncadd [#allocation3], 0
          %s129 = sshll.u32 %s2, 4
          %s130 = int_to_ptr.hbm [resolvable:$true] %s129
          %s131 = sshll.u32 [#allocation2], 4
          %s132 = int_to_ptr.vmem [resolvable:$true] %s131
          %137 = dma.hbm_to_vmem [thread:$0]  %s130, 22528, %s132, [#allocation3], 256, 256, 16
        $region16: #{mymolgen_forward.1} parent=11 // pred_fallthru
          _
      $region12: #{mymolgen_forward.1} parent=5 // pred_fallthru
        _
      %p138 = scmp.lt.s32.totalorder %s10, 2
      // Predicated region
      $region17: #{mymolgen_forward.1} parent=5 // pred_check
        %p139 = pneg %p138
      $region18: #{mymolgen_forward.1} parent=5 // pred_check_branch
        %141 = sbr.rel (%p139) target = $region20
      $region19: #{mymolgen_forward.1} parent=5 // pred_region
        // Predicated region
        $region21: #{mymolgen_forward.1} parent=19 // pred_check
          %p142 = pneg %p30
        $region22: #{mymolgen_forward.1} parent=19 // pred_check_branch
          %144 = sbr.rel (%p142) target = $region24
        $region23: #{mymolgen_forward.1} parent=19 // pred_region
          %p145 = scmp.lt.s32.totalorder %s10, 1
          %s146 = scalar_select %p145, %s10, 1
          %s147 = smul.addr %s146, 8
          %s148 = smul.addr %s147, 8
          %s149 = scalar_lea.vmem %s0, %s148
        $region24: #{mymolgen_forward.1} parent=19 // pred_fallthru
          _
        // Predicated region
        $region25: #{mymolgen_forward.1} parent=19 // pred_check
          %p150 = pneg %p56
        $region26: #{mymolgen_forward.1} parent=19 // pred_check_branch
          %152 = sbr.rel (%p150) target = $region28
        $region27: #{mymolgen_forward.1} parent=19 // pred_region
          %p153 = scmp.lt.s32.totalorder %s10, 1
          %s154 = scalar_select %p153, %s10, 1
          %s155 = smul.addr %s154, 4
          %s156 = smul.addr %s155, 2
          %s157 = scalar_lea.vmem %s1, %s156
        $region28: #{mymolgen_forward.1} parent=19 // pred_fallthru
          _
      $region20: #{mymolgen_forward.1} parent=5 // pred_fallthru
        _
      %p158 = scmp.le.s32.totalorder 1, %s10
      %p159 = scmp.lt.s32.totalorder %s10, 3
      %p160 = pnand %p158, %p159
      %p161 = pneg %p160
      // Predicated region
      $region29: #{mymolgen_forward.1} parent=5 // pred_check
        _
      $region30: #{mymolgen_forward.1} parent=5 // pred_check_branch
        %163 = sbr.rel (%p160) target = $region32
      $region31: #{mymolgen_forward.1} parent=5 // pred_region
        %s164 = ssub.s32 %s10, 1
        // Predicated region
        $region33: #{mymolgen_forward.1} parent=31 // pred_check
          %p165 = pneg %p83
        $region34: #{mymolgen_forward.1} parent=31 // pred_check_branch
          %167 = sbr.rel (%p165) target = $region36
        $region35: #{mymolgen_forward.1} parent=31 // pred_region
          %169 = dma.done [#allocation3], 22528
        $region36: #{mymolgen_forward.1} parent=31 // pred_fallthru
          _
        %p170 = scmp.lt.s32.totalorder %s15, 1
        %s171 = scalar_select %p170, %s15, 1
        %s172 = smul.addr %s171, 8
        %s173 = smul.addr %s172, 8
        %s174 = scalar_lea.vmem %s0, %s173
        %p175 = pneg %p36
        %p176 = pneg %p33
        %p177 = scmp.lt.s32.totalorder %s15, 1
        %s178 = scalar_select %p177, %s15, 1
        %s179 = smul.addr %s178, 4
        %s180 = smul.addr %s179, 2
        %s181 = scalar_lea.vmem %s1, %s180
        %p182 = pneg %p62
        %p183 = pneg %p59
        %p184 = pneg %p83
        %p185 = pneg %p80
        %p186 = pneg %p109
        %p187 = pneg %p106
        %p188 = scmp.lt.s32.totalorder %s15, 1
        %s189 = scalar_select %p188, %s15, 1
        %s190 = smul.addr %s189, 3
        %s191 = smul.addr %s190, 2
        %s192 = scalar_lea.vmem %s3, %s191
        %p193 = scmp.lt.s32.totalorder %s15, 1
        %s194 = scalar_select %p193, %s15, 1
        %s195 = smul.addr %s194, 8
        %s196 = smul.addr %s195, 8
        %s197 = scalar_lea.vmem %s0, %s196
        %p198 = scmp.lt.s32.totalorder %s15, 1
        %s199 = scalar_select %p198, %s15, 1
        %s200 = smul.addr %s199, 4
        %s201 = smul.addr %s200, 2
        %s202 = scalar_lea.vmem %s1, %s201
        %p203 = scmp.lt.s32.totalorder %s15, 1
        %s204 = scalar_select %p203, %s15, 1
        %s205 = smul.addr %s204, 3
        %s206 = smul.addr %s205, 2
        %s207 = scalar_lea.vmem %s3, %s206
        %v208 = vld [vmem:[%s197] sm:$0xff]
        %v209 = vld [vmem:[%s197 + $0x20] sm:$0xff]
        %v210 = vld [vmem:[%s197 + $0x8] sm:$0xff]
        %v211 = vld [vmem:[%s197 + $0x28] sm:$0xff]
        %v212 = vld [vmem:[%s197 + $0x10] sm:$0xff]
        %v213 = vld [vmem:[%s197 + $0x30] sm:$0xff]
        %v214 = vld [vmem:[%s197 + $0x18] sm:$0xff]
        %v215 = vld [vmem:[%s197 + $0x38] sm:$0xff]
        %v216 = vld [vmem:[%s202] sm:$0xf]
        %v217 = vld [vmem:[%s202 + $0x4] sm:$0x3]
        %v218 = vld [vmem:[%s202 + $0x6] sm:$0x3]
        %v219 = vlaneseq
        %v220 = vshrl.u32 %v219, 7
        %v221 = vadd.s32 %v220, 8
        %v222 = vlaneseq
        %v223 = vand.u32 %v222, 127
        %v224 = vld [vmem:[#allocation2 + $0x8] sm:$0xff]
        %v225 = vld [vmem:[#allocation2 + $0x18] sm:$0xff]
        %v226 = vld [vmem:[#allocation2 + $0x28] sm:$0xff]
        %v227 = vld [vmem:[#allocation2 + $0x38] sm:$0x3f]
        %v228 = vld [vmem:[#allocation2 + $0x70] ss:$0 sm:$0xff]
        %vm229 = vcmask 130048
        %v231 = vsel %vm229, %v214, 0
        %v234 = vsel %vm229, %v215, 0
        %236 = vmatpush.msra.mxu0 0.0
        %237 = vmatpush.msra.mxu0 0.0
        %238 = vmatpush.msra.mxu0 0.0
        %239 = vmatpush.msra.mxu0 0.0
        %240 = vmatpush.msra.mxu0 0.0
        %241 = vmatpush.msra.mxu0 0.0
        %242 = vmatpush.msra.mxu0 0.0
        %243 = vmatpush.msra.mxu0 0.0
        %244 = vmatpush.msra.mxu0 0.0
        %245 = vmatpush.msra.mxu0 0.0
        %246 = vmatpush.msra.mxu0 0.0
        %247 = vmatpush.msra.mxu0 0.0
        %248 = vmatpush.msra.mxu0 0.0
        %249 = vmatpush.msra.mxu0 0.0
        %250 = vmatpush.msra.mxu0 %v211
        %251 = vmatpush.msra.mxu0 %v210
        %252 = vmatmul.f32.gmra.mxu0 %v231
        %v253 = vpop.f32.mrf.mxu0
        %v254 = vadd.f32 1.0, %v253
        %255 = vmatmul.f32.gmra.mxu0 %v234
        %v256 = vpop.f32.mrf.mxu0
        %v257 = vadd.f32 1.0, %v256
        %258 = vdwg.mxu0
        %v259 = vrsqrt.pop %v254
        %v260 = vmul.f32 %v259, %v254
        %v261 = vmul.f32 %v260, %v259
        %v262 = vmul.f32 0.5, %v261
        %v263 = vsub.f32 1.5, %v262
        %v264 = vmul.f32 %v259, %v263
        %vm265 = vweird.f32 %v254
        %vm266 = vweird.f32 %v259
        %vm267 = vmor %vm265, %vm266
        %v268 = vsel %vm267, %v259, %v264
        %v269 = vrsqrt.pop %v257
        %v270 = vmul.f32 %v269, %v257
        %v271 = vmul.f32 %v270, %v269
        %v272 = vmul.f32 0.5, %v271
        %v273 = vsub.f32 1.5, %v272
        %v274 = vmul.f32 %v269, %v273
        %vm275 = vweird.f32 %v257
        %vm276 = vweird.f32 %v269
        %vm277 = vmor %vm275, %vm276
        %v278 = vsel %vm277, %v269, %v274
        %vm279 = vcmask 244736
        %v281 = vsel %vm279, %v208, 0
        %v284 = vsel %vm279, %v209, 0
        %vm286 = vcmask 1045504
        %v288 = vsel %vm286, %v227, 0
        %290 = vmatpush.msra.mxu0 0.0
        %291 = vmatpush.msra.mxu0 0.0
        %292 = vmatpush.msra.mxu0 0.0
        %293 = vmatpush.msra.mxu0 0.0
        %294 = vmatpush.msra.mxu0 0.0
        %295 = vmatpush.msra.mxu0 0.0
        %296 = vmatpush.msra.mxu0 0.0
        %297 = vmatpush.msra.mxu0 0.0
        %298 = vmatpush.msra.mxu0 0.0
        %299 = vmatpush.msra.mxu0 0.0
        %300 = vmatpush.msra.mxu0 0.0
        %301 = vmatpush.msra.mxu0 0.0
        %302 = vmatpush.msra.mxu0 %v288
        %303 = vmatpush.msra.mxu0 %v226
        %304 = vmatpush.msra.mxu0 %v225
        %305 = vmatpush.msra.mxu0 %v224
        %306 = vmatmul.f32.gmra.mxu0 %v281
        %v307 = vpop.f32.mrf.mxu0
        %v308 = vadd.f32 0.0, %v307
        %309 = vmatmul.f32.gmra.mxu0 %v284
        %v310 = vpop.f32.mrf.mxu0
        %v311 = vadd.f32 0.0, %v310
        %312 = vdwg.mxu0
        %314 = vset.pattern.permute.xlu0 0
        %315 = vperm.xlu0 %314, %v268
        %v316 = vpop.permute.xlu0 %315
        %319 = vset.pattern.permute.xlu0 0
        %320 = vperm.xlu0 %319, %v278
        %v321 = vpop.permute.xlu0 %320
        %v323 = vmul.f32 %v316, %v308
        %v324 = vmul.f32 %v321, %v311
        %326 = vset.pattern.permute.xlu0 0
        %327 = vperm.xlu0 %326, %v210
        %v328 = vpop.permute.xlu0 %327
        %331 = vset.pattern.permute.xlu0 0
        %332 = vperm.xlu0 %331, %v211
        %v333 = vpop.permute.xlu0 %332
        %v335 = vmul.f32 %v328, %v323
        %v336 = vmul.f32 %v333, %v324
        %337 = vmatpush.msra.mxu0 0.0
        %338 = vmatpush.msra.mxu0 0.0
        %339 = vmatpush.msra.mxu0 0.0
        %340 = vmatpush.msra.mxu0 0.0
        %341 = vmatpush.msra.mxu0 0.0
        %342 = vmatpush.msra.mxu0 0.0
        %343 = vmatpush.msra.mxu0 0.0
        %344 = vmatpush.msra.mxu0 0.0
        %345 = vmatpush.msra.mxu0 0.0
        %346 = vmatpush.msra.mxu0 0.0
        %347 = vmatpush.msra.mxu0 0.0
        %348 = vmatpush.msra.mxu0 0.0
        %349 = vmatpush.msra.mxu0 0.0
        %350 = vmatpush.msra.mxu0 0.0
        %351 = vmatpush.msra.mxu0 %v336
        %352 = vmatpush.msra.mxu0 %v335
        %353 = vmatmul.f32.gmra.mxu0 %v231
        %v354 = vpop.f32.mrf.mxu0
        %v355 = vadd.f32 %v323, %v354
        %356 = vmatmul.f32.gmra.mxu0 %v234
        %v357 = vpop.f32.mrf.mxu0
        %v358 = vadd.f32 %v324, %v357
        %359 = vdwg.mxu0
        %v360 = vmul.f32 %v316, %v355
        %v361 = vmul.f32 %v321, %v358
        %v362 = vadd.f32 %v360, %v228
        %v363 = vadd.f32 %v361, %v228
        %v364 = vmax.f32 %v362, 0.0
        %v365 = vmax.f32 %v363, 0.0
        %v366 = vld [vmem:[#allocation2 + $0x80] ss:$0 sm:$0xff]
        %v367 = vmul.f32 %v366, %v366
        %vm368 = vcmask 401408
        %v369 = vsel %vm368, %v367, 0.0
        %370 = vadd.xlane.f32.xlu0 %v369
        %v371 = vpop.xlane.xlu0 %370
        %v372 = vrot.slane %v371, 4
        %v373 = vadd.f32 %v371, %v372
        %v374 = vrot.slane %v373, 2
        %v375 = vadd.f32 %v373, %v374
        %v376 = vrot.slane %v375, 1
        %v377 = vadd.f32 %v375, %v376
        %s378 = vtos %v377
        %v379 = vstv %s378
        %v380 = vrsqrt.pop %v379
        %v381 = vmul.f32 %v380, %v379
        %v382 = vmul.f32 %v381, %v380
        %v383 = vmul.f32 0.5, %v382
        %v384 = vsub.f32 1.5, %v383
        %v385 = vmul.f32 %v380, %v384
        %vm386 = vweird.f32 %v379
        %vm387 = vweird.f32 %v380
        %vm388 = vmor %vm386, %vm387
        %v389 = vsel %vm388, %v380, %v385
        %v390 = vmul.f32 %v364, %v366
        %v391 = vmul.f32 %v365, %v366
        %vm392 = vcmask 408576
        %v393 = vsel %vm392, %v390, 0.0
        %394 = vadd.xlane.f32.xlu0 %v393
        %v395 = vpop.xlane.xlu0 %394
        %v396 = vsel %vm392, %v391, 0.0
        %397 = vadd.xlane.f32.xlu0 %v396
        %v398 = vpop.xlane.xlu0 %397
        %v399 = vmul.f32 %v395, %v389
        %v400 = vmul.f32 %v398, %v389
        %v401 = vtanh.pop %v399
        %v402 = vtanh.pop %v400
        %v404 = vsel %vm392, %v366, 0
        %v407 = vsel %vm392, %v364, 0
        %v410 = vsel %vm392, %v365, 0
        %412 = vmatpush.xpose.msra.mxu0 0.0
        %413 = vmatpush.xpose.msra.mxu0 0.0
        %414 = vmatpush.xpose.msra.mxu0 0.0
        %415 = vmatpush.xpose.msra.mxu0 0.0
        %416 = vmatpush.xpose.msra.mxu0 0.0
        %417 = vmatpush.xpose.msra.mxu0 0.0
        %418 = vmatpush.xpose.msra.mxu0 0.0
        %419 = vmatpush.xpose.msra.mxu0 0.0
        %420 = vmatpush.xpose.msra.mxu0 0.0
        %421 = vmatpush.xpose.msra.mxu0 0.0
        %422 = vmatpush.xpose.msra.mxu0 0.0
        %423 = vmatpush.xpose.msra.mxu0 0.0
        %424 = vmatpush.xpose.msra.mxu0 0.0
        %425 = vmatpush.xpose.msra.mxu0 0.0
        %426 = vmatpush.xpose.msra.mxu0 %v410
        %427 = vmatpush.xpose.msra.mxu0 %v407
        %428 = vmatmul.f32.gmra.mxu0 %v404
        %v429 = vpop.f32.mrf.mxu0
        %v430 = vadd.f32 0.0, %v429
        %431 = vdwg.mxu0
        %v432 = vmul.f32 %v430, %v389
        %v433 = vtanh.pop %v432
        %v434 = vperm.slane %v433, 0
        %vm435 = vcmp.gt.f32.partialorder %v434, %v401
        %vm436 = vcmp.gt.f32.partialorder %v434, %v402
        %vm437 = vcmp.eq.f32.partialorder %v434, %v401
        %vm438 = vcmp.eq.f32.partialorder %v434, %v402
        %vm439 = vcmp.lt.s32.totalorder %v223, %v220
        %vm440 = vcmp.lt.s32.totalorder %v223, %v221
        %vm441 = vmand %vm437, %vm439
        %vm442 = vmand %vm438, %vm440
        %vm443 = vmor %vm435, %vm441
        %vm444 = vmor %vm436, %vm442
        %vm445 = vcmp.ne.s32.totalorder %v223, %v220
        %vm446 = vcmp.ne.s32.totalorder %v223, %v221
        %vm447 = vmand %vm443, %vm445
        %vm448 = vmand %vm444, %vm446
        %v449 = vsel %vm447, 1.0, 0.0
        %v450 = vsel %vm448, 1.0, 0.0
        %v451 = vmul.f32 %v212, %v328
        %v452 = vmul.f32 %v213, %v333
        %v454 = vsel %vm229, %v449, 0
        %v457 = vsel %vm229, %v450, 0
        %459 = vmatpush.msra.mxu0 0.0
        %460 = vmatpush.msra.mxu0 0.0
        %461 = vmatpush.msra.mxu0 0.0
        %462 = vmatpush.msra.mxu0 0.0
        %463 = vmatpush.msra.mxu0 0.0
        %464 = vmatpush.msra.mxu0 0.0
        %465 = vmatpush.msra.mxu0 0.0
        %466 = vmatpush.msra.mxu0 0.0
        %467 = vmatpush.msra.mxu0 0.0
        %468 = vmatpush.msra.mxu0 0.0
        %469 = vmatpush.msra.mxu0 0.0
        %470 = vmatpush.msra.mxu0 0.0
        %471 = vmatpush.msra.mxu0 0.0
        %472 = vmatpush.msra.mxu0 0.0
        %473 = vmatpush.msra.mxu0 %v452
        %474 = vmatpush.msra.mxu0 %v451
        %475 = vmatmul.f32.gmra.mxu0 %v454
        %v476 = vpop.f32.mrf.mxu0
        %v477 = vadd.f32 0.0, %v476
        %478 = vmatmul.f32.gmra.mxu0 %v457
        %v479 = vpop.f32.mrf.mxu0
        %v480 = vadd.f32 0.0, %v479
        %481 = vdwg.mxu0
        %v482 = vmul.f32 %v477, %v212
        %v483 = vmul.f32 %v480, %v213
        %vm484 = vcmask 15360
        %v485 = vsel %vm484, %v482, 0.0
        %486 = vadd.xlane.f32.xlu0 %v485
        %v487 = vpop.xlane.xlu0 %486
        %v488 = vsel %vm484, %v483, 0.0
        %489 = vadd.xlane.f32.xlu0 %v488
        %v490 = vpop.xlane.xlu0 %489
        %vm491 = vcmp.gt.f32.partialorder %v210, 0.0
        %vm492 = vcmp.gt.f32.partialorder %v211, 0.0
        %vm493 = vcmp.lt.f32.partialorder %v487, %v210
        %vm494 = vcmp.lt.f32.partialorder %v490, %v211
        %v495 = vsel %vm493, 1, 0
        %v496 = vsel %vm494, 1, 0
        %497 = vrot.lane.b32.xlu0 %v495, 127
        %v498 = vpop.permute.xlu0 %497
        %499 = vrot.lane.b32.xlu0 %v496, 127
        %v500 = vpop.permute.xlu0 %499
        %vm501 = vcmp.ne.s32.totalorder %v498, 0
        %vm502 = vcmp.ne.s32.totalorder %v500, 0
        %vm503 = vmand %vm491, %vm501
        %vm504 = vmand %vm492, %vm502
        %v505 = vsel %vm503, 1.0, 0.0
        %v506 = vsel %vm504, 1.0, 0.0
        %v507 = vmul.f32 %v364, %v401
        %v508 = vmul.f32 %v365, %v402
        %510 = vset.pattern.permute.xlu0 0
        %511 = vperm.xlu0 %510, %v505
        %v512 = vpop.permute.xlu0 %511
        %515 = vset.pattern.permute.xlu0 0
        %516 = vperm.xlu0 %515, %v506
        %v517 = vpop.permute.xlu0 %516
        %v519 = vmul.f32 %v507, %v512
        %v520 = vmul.f32 %v508, %v517
        %v521 = vld [vmem:[#allocation2] sm:$0xff]
        %v522 = vld [vmem:[#allocation2 + $0x10] sm:$0xff]
        %v523 = vld [vmem:[#allocation2 + $0x20] sm:$0xff]
        %v524 = vld [vmem:[#allocation2 + $0x30] sm:$0xff]
        %v525 = vld [vmem:[#allocation2 + $0x40] sm:$0xff]
        %v526 = vld [vmem:[#allocation2 + $0x50] sm:$0xff]
        %v527 = vld [vmem:[#allocation2 + $0x60] sm:$0x3]
        %v528 = vld [vmem:[#allocation2 + $0x78] ss:$0 sm:$0xff]
        %529 = vmatpush.msra.mxu0 0.0
        %530 = vmatpush.msra.mxu0 0.0
        %531 = vmatpush.msra.mxu0 0.0
        %532 = vmatpush.msra.mxu0 0.0
        %533 = vmatpush.msra.mxu0 0.0
        %534 = vmatpush.msra.mxu0 0.0
        %535 = vmatpush.msra.mxu0 0.0
        %536 = vmatpush.msra.mxu0 0.0
        %537 = vmatpush.msra.mxu0 0.0
        %538 = vmatpush.msra.mxu0 0.0
        %539 = vmatpush.msra.mxu0 0.0
        %540 = vmatpush.msra.mxu0 0.0
        %541 = vmatpush.msra.mxu0 0.0
        %542 = vmatpush.msra.mxu0 0.0
        %543 = vmatpush.msra.mxu0 %v506
        %544 = vmatpush.msra.mxu0 %v505
        %545 = vmatmul.f32.gmra.mxu0 %v231
        %v546 = vpop.f32.mrf.mxu0
        %v547 = vadd.f32 1.0, %v546
        %548 = vmatmul.f32.gmra.mxu0 %v234
        %v549 = vpop.f32.mrf.mxu0
        %v550 = vadd.f32 1.0, %v549
        %551 = vdwg.mxu0
        %v552 = vrsqrt.pop %v547
        %v553 = vmul.f32 %v552, %v547
        %v554 = vmul.f32 %v553, %v552
        %v555 = vmul.f32 0.5, %v554
        %v556 = vsub.f32 1.5, %v555
        %v557 = vmul.f32 %v552, %v556
        %vm558 = vweird.f32 %v547
        %vm559 = vweird.f32 %v552
        %vm560 = vmor %vm558, %vm559
        %v561 = vsel %vm560, %v552, %v557
        %v562 = vrsqrt.pop %v550
        %v563 = vmul.f32 %v562, %v550
        %v564 = vmul.f32 %v563, %v562
        %v565 = vmul.f32 0.5, %v564
        %v566 = vsub.f32 1.5, %v565
        %v567 = vmul.f32 %v562, %v566
        %vm568 = vweird.f32 %v550
        %vm569 = vweird.f32 %v562
        %vm570 = vmor %vm568, %vm569
        %v571 = vsel %vm570, %v562, %v567
        %v573 = vsel %vm392, %v519, 0
        %v576 = vsel %vm392, %v520, 0
        %vm578 = vcmask 1041408
        %v580 = vsel %vm578, %v527, 0
        %582 = vmatpush.msra.mxu0 0.0
        %583 = vmatpush.msra.mxu0 0.0
        %584 = vmatpush.msra.mxu0 0.0
        %585 = vmatpush.msra.mxu0 0.0
        %586 = vmatpush.msra.mxu0 0.0
        %587 = vmatpush.msra.mxu0 0.0
        %588 = vmatpush.msra.mxu0 0.0
        %589 = vmatpush.msra.mxu0 0.0
        %590 = vmatpush.msra.mxu0 0.0
        %591 = vmatpush.msra.mxu0 %v580
        %592 = vmatpush.msra.mxu0 %v526
        %593 = vmatpush.msra.mxu0 %v525
        %594 = vmatpush.msra.mxu0 %v524
        %595 = vmatpush.msra.mxu0 %v523
        %596 = vmatpush.msra.mxu0 %v522
        %597 = vmatpush.msra.mxu0 %v521
        %598 = vmatmul.f32.gmra.mxu0 %v573
        %v599 = vpop.f32.mrf.mxu0
        %v600 = vadd.f32 0.0, %v599
        %601 = vmatmul.f32.gmra.mxu0 %v576
        %v602 = vpop.f32.mrf.mxu0
        %v603 = vadd.f32 0.0, %v602
        %604 = vdwg.mxu0
        %606 = vset.pattern.permute.xlu0 0
        %607 = vperm.xlu0 %606, %v561
        %v608 = vpop.permute.xlu0 %607
        %611 = vset.pattern.permute.xlu0 0
        %612 = vperm.xlu0 %611, %v571
        %v613 = vpop.permute.xlu0 %612
        %v615 = vmul.f32 %v608, %v600
        %v616 = vmul.f32 %v613, %v603
        %v617 = vmul.f32 %v512, %v615
        %v618 = vmul.f32 %v517, %v616
        %619 = vmatpush.msra.mxu0 0.0
        %620 = vmatpush.msra.mxu0 0.0
        %621 = vmatpush.msra.mxu0 0.0
        %622 = vmatpush.msra.mxu0 0.0
        %623 = vmatpush.msra.mxu0 0.0
        %624 = vmatpush.msra.mxu0 0.0
        %625 = vmatpush.msra.mxu0 0.0
        %626 = vmatpush.msra.mxu0 0.0
        %627 = vmatpush.msra.mxu0 0.0
        %628 = vmatpush.msra.mxu0 0.0
        %629 = vmatpush.msra.mxu0 0.0
        %630 = vmatpush.msra.mxu0 0.0
        %631 = vmatpush.msra.mxu0 0.0
        %632 = vmatpush.msra.mxu0 0.0
        %633 = vmatpush.msra.mxu0 %v618
        %634 = vmatpush.msra.mxu0 %v617
        %635 = vmatmul.f32.gmra.mxu0 %v231
        %v636 = vpop.f32.mrf.mxu0
        %v637 = vadd.f32 %v615, %v636
        %638 = vmatmul.f32.gmra.mxu0 %v234
        %v639 = vpop.f32.mrf.mxu0
        %v640 = vadd.f32 %v616, %v639
        %641 = vdwg.mxu0
        %v642 = vmul.f32 %v608, %v637
        %v643 = vmul.f32 %v613, %v640
        %v644 = vadd.f32 %v642, %v528
        %v645 = vadd.f32 %v643, %v528
        %v646 = vmax.f32 %v644, 0.0
        %v647 = vmax.f32 %v645, 0.0
        %v648 = vld [vmem:[#allocation2 + $0x88] ss:$0 sm:$0xff]
        %v649 = vmul.f32 %v648, %v648
        %vm650 = vcmask 811008
        %v651 = vsel %vm650, %v649, 0.0
        %652 = vadd.xlane.f32.xlu0 %v651
        %v653 = vpop.xlane.xlu0 %652
        %v654 = vrot.slane %v653, 4
        %v655 = vadd.f32 %v653, %v654
        %v656 = vrot.slane %v655, 2
        %v657 = vadd.f32 %v655, %v656
        %v658 = vrot.slane %v657, 1
        %v659 = vadd.f32 %v657, %v658
        %s660 = vtos %v659
        %v661 = vstv %s660
        %v662 = vrsqrt.pop %v661
        %v663 = vmul.f32 %v662, %v661
        %v664 = vmul.f32 %v663, %v662
        %v665 = vmul.f32 0.5, %v664
        %v666 = vsub.f32 1.5, %v665
        %v667 = vmul.f32 %v662, %v666
        %vm668 = vweird.f32 %v661
        %vm669 = vweird.f32 %v662
        %vm670 = vmor %vm668, %vm669
        %v671 = vsel %vm670, %v662, %v667
        %v672 = vmul.f32 %v646, %v648
        %v673 = vmul.f32 %v647, %v648
        %vm674 = vcmask 818176
        %v675 = vsel %vm674, %v672, 0.0
        %676 = vadd.xlane.f32.xlu0 %v675
        %v677 = vpop.xlane.xlu0 %676
        %v678 = vsel %vm674, %v673, 0.0
        %679 = vadd.xlane.f32.xlu0 %v678
        %v680 = vpop.xlane.xlu0 %679
        %v681 = vmul.f32 %v677, %v671
        %v682 = vmul.f32 %v680, %v671
        %v683 = vtanh.pop %v681
        %v684 = vtanh.pop %v682
        %v686 = vsel %vm674, %v648, 0
        %v689 = vsel %vm674, %v646, 0
        %v692 = vsel %vm674, %v647, 0
        %694 = vmatpush.xpose.msra.mxu0 0.0
        %695 = vmatpush.xpose.msra.mxu0 0.0
        %696 = vmatpush.xpose.msra.mxu0 0.0
        %697 = vmatpush.xpose.msra.mxu0 0.0
        %698 = vmatpush.xpose.msra.mxu0 0.0
        %699 = vmatpush.xpose.msra.mxu0 0.0
        %700 = vmatpush.xpose.msra.mxu0 0.0
        %701 = vmatpush.xpose.msra.mxu0 0.0
        %702 = vmatpush.xpose.msra.mxu0 0.0
        %703 = vmatpush.xpose.msra.mxu0 0.0
        %704 = vmatpush.xpose.msra.mxu0 0.0
        %705 = vmatpush.xpose.msra.mxu0 0.0
        %706 = vmatpush.xpose.msra.mxu0 0.0
        %707 = vmatpush.xpose.msra.mxu0 0.0
        %708 = vmatpush.xpose.msra.mxu0 %v692
        %709 = vmatpush.xpose.msra.mxu0 %v689
        %710 = vmatmul.f32.gmra.mxu0 %v686
        %v711 = vpop.f32.mrf.mxu0
        %v712 = vadd.f32 0.0, %v711
        %713 = vdwg.mxu0
        %v714 = vmul.f32 %v712, %v671
        %v715 = vtanh.pop %v714
        %v716 = vperm.slane %v715, 0
        %vm717 = vcmp.gt.f32.partialorder %v716, %v683
        %vm718 = vcmp.gt.f32.partialorder %v716, %v684
        %vm719 = vcmp.eq.f32.partialorder %v716, %v683
        %vm720 = vcmp.eq.f32.partialorder %v716, %v684
        %vm721 = vmand %vm719, %vm439
        %vm722 = vmand %vm720, %vm440
        %vm723 = vmor %vm717, %vm721
        %vm724 = vmor %vm718, %vm722
        %vm725 = vmand %vm723, %vm445
        %vm726 = vmand %vm724, %vm446
        %v727 = vsel %vm725, 1.0, 0.0
        %v728 = vsel %vm726, 1.0, 0.0
        %v729 = vmul.f32 %v212, %v512
        %v730 = vmul.f32 %v213, %v517
        %v732 = vsel %vm229, %v727, 0
        %v735 = vsel %vm229, %v728, 0
        %737 = vmatpush.msra.mxu0 0.0
        %738 = vmatpush.msra.mxu0 0.0
        %739 = vmatpush.msra.mxu0 0.0
        %740 = vmatpush.msra.mxu0 0.0
        %741 = vmatpush.msra.mxu0 0.0
        %742 = vmatpush.msra.mxu0 0.0
        %743 = vmatpush.msra.mxu0 0.0
        %744 = vmatpush.msra.mxu0 0.0
        %745 = vmatpush.msra.mxu0 0.0
        %746 = vmatpush.msra.mxu0 0.0
        %747 = vmatpush.msra.mxu0 0.0
        %748 = vmatpush.msra.mxu0 0.0
        %749 = vmatpush.msra.mxu0 0.0
        %750 = vmatpush.msra.mxu0 0.0
        %751 = vmatpush.msra.mxu0 %v730
        %752 = vmatpush.msra.mxu0 %v729
        %753 = vmatmul.f32.gmra.mxu0 %v732
        %v754 = vpop.f32.mrf.mxu0
        %v755 = vadd.f32 0.0, %v754
        %756 = vmatmul.f32.gmra.mxu0 %v735
        %v757 = vpop.f32.mrf.mxu0
        %v758 = vadd.f32 0.0, %v757
        %759 = vdwg.mxu0
        %v760 = vmul.f32 %v755, %v212
        %v761 = vmul.f32 %v758, %v213
        %v762 = vsel %vm484, %v760, 0.0
        %763 = vadd.xlane.f32.xlu0 %v762
        %v764 = vpop.xlane.xlu0 %763
        %v765 = vsel %vm484, %v761, 0.0
        %766 = vadd.xlane.f32.xlu0 %v765
        %v767 = vpop.xlane.xlu0 %766
        %v769 = vsel %vm229, %v218, 0
        %771 = vmatpush.msra.mxu0 0.0
        %772 = vmatpush.msra.mxu0 0.0
        %773 = vmatpush.msra.mxu0 0.0
        %774 = vmatpush.msra.mxu0 0.0
        %775 = vmatpush.msra.mxu0 0.0
        %776 = vmatpush.msra.mxu0 0.0
        %777 = vmatpush.msra.mxu0 0.0
        %778 = vmatpush.msra.mxu0 0.0
        %779 = vmatpush.msra.mxu0 0.0
        %780 = vmatpush.msra.mxu0 0.0
        %781 = vmatpush.msra.mxu0 0.0
        %782 = vmatpush.msra.mxu0 0.0
        %783 = vmatpush.msra.mxu0 0.0
        %784 = vmatpush.msra.mxu0 0.0
        %785 = vmatpush.msra.mxu0 %v506
        %786 = vmatpush.msra.mxu0 %v505
        %787 = vmatmul.f32.gmra.mxu0 %v769
        %v788 = vpop.f32.mrf.mxu0
        %v789 = vadd.f32 0.0, %v788
        %790 = vdwg.mxu0
        %v792 = vsel %vm484, %v212, 0
        %v795 = vsel %vm484, %v213, 0
        %v798 = vsel %vm578, %v789, 0
        %800 = vmatpush.msra.mxu0 0.0
        %801 = vmatpush.msra.mxu0 0.0
        %802 = vmatpush.msra.mxu0 0.0
        %803 = vmatpush.msra.mxu0 0.0
        %804 = vmatpush.msra.mxu0 0.0
        %805 = vmatpush.msra.mxu0 0.0
        %806 = vmatpush.msra.mxu0 0.0
        %807 = vmatpush.msra.mxu0 0.0
        %808 = vmatpush.msra.mxu0 0.0
        %809 = vmatpush.msra.mxu0 0.0
        %810 = vmatpush.msra.mxu0 0.0
        %811 = vmatpush.msra.mxu0 0.0
        %812 = vmatpush.msra.mxu0 0.0
        %813 = vmatpush.msra.mxu0 0.0
        %814 = vmatpush.msra.mxu0 0.0
        %815 = vmatpush.msra.mxu0 %v798
        %816 = vmatmul.f32.gmra.mxu0 %v792
        %v817 = vpop.f32.mrf.mxu0
        %v818 = vadd.f32 0.0, %v817
        %819 = vmatmul.f32.gmra.mxu0 %v795
        %v820 = vpop.f32.mrf.mxu0
        %v821 = vadd.f32 0.0, %v820
        %822 = vdwg.mxu0
        %v823 = vmul.f32 %v818, 0.8
        %v824 = vmul.f32 %v821, 0.8
        %v825 = vceil.f32 %v823
        %v826 = vceil.f32 %v824
        %vm827 = vcmp.gt.f32.partialorder %v505, 0.0
        %vm828 = vcmp.gt.f32.partialorder %v506, 0.0
        %vm829 = vcmp.lt.f32.partialorder %v764, %v825
        %vm830 = vcmp.lt.f32.partialorder %v767, %v826
        %vm831 = vmand %vm827, %vm829
        %vm832 = vmand %vm828, %vm830
        %v833 = vsel %vm831, 1.0, 0.0
        %v834 = vsel %vm832, 1.0, 0.0
        %v835 = vmul.f32 %v646, %v683
        %v836 = vmul.f32 %v647, %v684
        %838 = vset.pattern.permute.xlu0 0
        %839 = vperm.xlu0 %838, %v833
        %v840 = vpop.permute.xlu0 %839
        %843 = vset.pattern.permute.xlu0 0
        %844 = vperm.xlu0 %843, %v834
        %v845 = vpop.permute.xlu0 %844
        %v847 = vmul.f32 %v835, %v840
        %v848 = vmul.f32 %v836, %v845
        %849 = vmatpush.msra.mxu0 0.0
        %850 = vmatpush.msra.mxu0 0.0
        %851 = vmatpush.msra.mxu0 0.0
        %852 = vmatpush.msra.mxu0 0.0
        %853 = vmatpush.msra.mxu0 0.0
        %854 = vmatpush.msra.mxu0 0.0
        %855 = vmatpush.msra.mxu0 0.0
        %856 = vmatpush.msra.mxu0 0.0
        %857 = vmatpush.msra.mxu0 0.0
        %858 = vmatpush.msra.mxu0 0.0
        %859 = vmatpush.msra.mxu0 0.0
        %860 = vmatpush.msra.mxu0 0.0
        %861 = vmatpush.msra.mxu0 0.0
        %862 = vmatpush.msra.mxu0 0.0
        %863 = vmatpush.msra.mxu0 %v834
        %864 = vmatpush.msra.mxu0 %v833
        %865 = vmatmul.f32.gmra.mxu0 %v769
        %v866 = vpop.f32.mrf.mxu0
        %v867 = vadd.f32 0.0, %v866
        %868 = vdwg.mxu0
        %869 = vmatpush.msra.mxu0 0.0
        %870 = vmatpush.msra.mxu0 0.0
        %871 = vmatpush.msra.mxu0 0.0
        %872 = vmatpush.msra.mxu0 0.0
        %873 = vmatpush.msra.mxu0 0.0
        %874 = vmatpush.msra.mxu0 0.0
        %875 = vmatpush.msra.mxu0 0.0
        %876 = vmatpush.msra.mxu0 0.0
        %877 = vmatpush.msra.mxu0 0.0
        %878 = vmatpush.msra.mxu0 0.0
        %879 = vmatpush.msra.mxu0 0.0
        %880 = vmatpush.msra.mxu0 0.0
        %881 = vmatpush.msra.mxu0 0.0
        %882 = vmatpush.msra.mxu0 0.0
        %883 = vmatpush.msra.mxu0 %v848
        %884 = vmatpush.msra.mxu0 %v847
        %885 = vmatmul.f32.gmra.mxu0 %v769
        %v886 = vpop.f32.mrf.mxu0
        %v887 = vadd.f32 0.0, %v886
        %888 = vdwg.mxu0
        %890 = vset.pattern.permute.xlu0 0
        %891 = vperm.xlu0 %890, %v867
        %v892 = vpop.permute.xlu0 %891
        %v894 = vrcp.pop %v892
        %v895 = vmul.f32 %v892, %v894
        %v896 = vsub.f32 1.0, %v895
        %v897 = vmul.f32 %v894, %v896
        %v898 = vadd.f32 %v894, %v897
        %vm899 = vweird.f32 %v892
        %vm900 = vweird.f32 %v894
        %vm901 = vmor %vm899, %vm900
        %v902 = vsel %vm901, %v894, %v898
        %v903 = vand.u32 2147483647, %v892
        %vm904 = vcmp.eq.f32.partialorder %v903, 8.507059e+37
        %v905 = vand.u32 %v892, 2147483648
        %v906 = vor.u32 1.1754944e-38, %v905
        %v907 = vsel %vm904, %v906, %v902
        %v908 = vmul.f32 %v887, %v907
        %v909 = vmul.f32 %v212, %v840
        %v910 = vmul.f32 %v213, %v845
        %vm911 = vcmp.gt.f32.partialorder %v909, 0.0
        %vm912 = vcmp.gt.f32.partialorder %v910, 0.0
        %v913 = vsel %vm911, 1, 0
        %v914 = vsel %vm912, 1, 0
        %915 = vset.pattern.permute.xlu0 0
        %916 = vperm.xlu0 %915, %v913
        %v917 = vpop.permute.xlu0 %916
        %918 = vset.pattern.permute.xlu0 0
        %919 = vperm.xlu0 %918, %v914
        %v920 = vpop.permute.xlu0 %919
        %vm921 = vcmp.eq.s32.totalorder %v917, 1
        %vm922 = vcmp.eq.s32.totalorder %v920, 1
        %v923 = vsel %vm921, %v847, -1e+30
        %v924 = vsel %vm922, %v848, -1e+30
        %v925 = vsel %vm674, %v923, -inf
        %v926 = vsel %vm674, %v924, -inf
        %v927 = vmax.f32 %v925, %v926
        %v928 = vrot.slane %v927, 4
        %v929 = vmax.f32 %v927, %v928
        %v930 = vrot.slane %v929, 2
        %v931 = vmax.f32 %v929, %v930
        %v932 = vrot.slane %v931, 1
        %v933 = vmax.f32 %v931, %v932
        %vm934 = vcmp.eq.s32.totalorder %v220, 0
        %v935 = vsel %vm934, %v933, -1e+30
        %936 = vset.pattern.permute.xlu0 1
        %937 = vperm.xlu0 %936, %v913
        %v938 = vpop.permute.xlu0 %937
        %939 = vset.pattern.permute.xlu0 1
        %940 = vperm.xlu0 %939, %v914
        %v941 = vpop.permute.xlu0 %940
        %vm942 = vcmp.eq.s32.totalorder %v938, 1
        %vm943 = vcmp.eq.s32.totalorder %v941, 1
        %v944 = vsel %vm942, %v847, -1e+30
        %v945 = vsel %vm943, %v848, -1e+30
        %v946 = vsel %vm674, %v944, -inf
        %v947 = vsel %vm674, %v945, -inf
        %v948 = vmax.f32 %v946, %v947
        %v949 = vrot.slane %v948, 4
        %v950 = vmax.f32 %v948, %v949
        %v951 = vrot.slane %v950, 2
        %v952 = vmax.f32 %v950, %v951
        %v953 = vrot.slane %v952, 1
        %v954 = vmax.f32 %v952, %v953
        %vm955 = vcmp.eq.s32.totalorder %v220, 1
        %v956 = vsel %vm955, %v954, %v935
        %v957 = vld [vmem:[#allocation2 + $0x90] sm:$0xff]
        %v958 = vld [vmem:[#allocation2 + $0xa0] sm:$0xff]
        %v959 = vld [vmem:[#allocation2 + $0xb0] sm:$0xff]
        %v960 = vld [vmem:[#allocation2 + $0xc0] sm:$0xff]
        %v961 = vld [vmem:[#allocation2 + $0xd0] sm:$0xff]
        %v962 = vld [vmem:[#allocation2 + $0xe0] sm:$0xff]
        %v963 = vld [vmem:[#allocation2 + $0xf0] sm:$0xff]
        %v964 = vld [vmem:[#allocation2 + $0x100] sm:$0xff]
        %v965 = vld [vmem:[#allocation2 + $0x110] sm:$0xff]
        %v966 = vld [vmem:[#allocation2 + $0x120] sm:$0xff]
        %v967 = vld [vmem:[#allocation2 + $0x130] sm:$0xff]
        %v968 = vld [vmem:[#allocation2 + $0x140] sm:$0xff]
        %v969 = vld [vmem:[#allocation2 + $0x150] sm:$0xf]
        %v970 = vld [vmem:[#allocation2 + $0x98] sm:$0xff]
        %v971 = vld [vmem:[#allocation2 + $0xa8] sm:$0xff]
        %v972 = vld [vmem:[#allocation2 + $0xb8] sm:$0xff]
        %v973 = vld [vmem:[#allocation2 + $0xc8] sm:$0xff]
        %v974 = vld [vmem:[#allocation2 + $0xd8] sm:$0xff]
        %v975 = vld [vmem:[#allocation2 + $0xe8] sm:$0xff]
        %v976 = vld [vmem:[#allocation2 + $0xf8] sm:$0xff]
        %v977 = vld [vmem:[#allocation2 + $0x108] sm:$0xff]
        %v978 = vld [vmem:[#allocation2 + $0x118] sm:$0xff]
        %v979 = vld [vmem:[#allocation2 + $0x128] sm:$0xff]
        %v980 = vld [vmem:[#allocation2 + $0x138] sm:$0xff]
        %v981 = vld [vmem:[#allocation2 + $0x148] sm:$0xff]
        %v982 = vld [vmem:[#allocation2 + $0x158] sm:$0xf]
        %v984 = vsel %vm674, %v908, 0
        %vm986 = vcmask 1043456
        %v988 = vsel %vm986, %v982, 0
        %990 = vmatpush.msra.mxu0 0.0
        %991 = vmatpush.msra.mxu0 0.0
        %992 = vmatpush.msra.mxu0 0.0
        %993 = vmatpush.msra.mxu0 %v988
        %994 = vmatpush.msra.mxu0 %v981
        %995 = vmatpush.msra.mxu0 %v980
        %996 = vmatpush.msra.mxu0 %v979
        %997 = vmatpush.msra.mxu0 %v978
        %998 = vmatpush.msra.mxu0 %v977
        %999 = vmatpush.msra.mxu0 %v976
        %1000 = vmatpush.msra.mxu0 %v975
        %1001 = vmatpush.msra.mxu0 %v974
        %1002 = vmatpush.msra.mxu0 %v973
        %1003 = vmatpush.msra.mxu0 %v972
        %1004 = vmatpush.msra.mxu0 %v971
        %1005 = vmatpush.msra.mxu0 %v970
        %1006 = vmatmul.f32.gmra.mxu0 %v984
        %v1007 = vpop.f32.mrf.mxu0
        %v1008 = vadd.f32 0.0, %v1007
        %1009 = vdwg.mxu0
        %v1011 = vsel %vm674, %v956, 0
        %v1014 = vsel %vm986, %v969, 0
        %1016 = vmatpush.msra.mxu0 0.0
        %1017 = vmatpush.msra.mxu0 0.0
        %1018 = vmatpush.msra.mxu0 0.0
        %1019 = vmatpush.msra.mxu0 %v1014
        %1020 = vmatpush.msra.mxu0 %v968
        %1021 = vmatpush.msra.mxu0 %v967
        %1022 = vmatpush.msra.mxu0 %v966
        %1023 = vmatpush.msra.mxu0 %v965
        %1024 = vmatpush.msra.mxu0 %v964
        %1025 = vmatpush.msra.mxu0 %v963
        %1026 = vmatpush.msra.mxu0 %v962
        %1027 = vmatpush.msra.mxu0 %v961
        %1028 = vmatpush.msra.mxu0 %v960
        %1029 = vmatpush.msra.mxu0 %v959
        %1030 = vmatpush.msra.mxu0 %v958
        %1031 = vmatpush.msra.mxu0 %v957
        %1032 = vmatmul.f32.gmra.mxu0 %v1011
        %v1033 = vpop.f32.mrf.mxu0
        %v1034 = vadd.f32 %v1008, %v1033
        %1035 = vdwg.mxu0
        %v1036 = vld [vmem:[#allocation2 + $0x160] ss:$0 sm:$0xff]
        %v1037 = vadd.f32 %v1034, %v1036
        %v1038 = vmax.f32 %v1037, 0.0
        %vm1039 = vcmp.lt.s32.totalorder %v223, 50
        %v1040 = vsel %vm1039, 1, 0
        %v1041 = vcvt.s32.f32 %v1040
        %v1042 = vmul.f32 %v1038, %v1041
        %v1043 = vsub.f32 1.0, %v1041
        %v1044 = vmul.f32 %v1038, %v1043
        %v1045 = vmul.f32 %v1044, 1.442695
        %v1046 = vpow.pop %v1045
        %v1047 = vmul.f32 %v217, %v1046
        %v1048 = vadd.f32 %v1042, %v1047
        %v1049 = vld [vmem:[#allocation2 + $0x178] sm:$0xff]
        %v1050 = vld [vmem:[#allocation2 + $0x188] sm:$0xff]
        %v1051 = vld [vmem:[#allocation2 + $0x198] sm:$0xff]
        %v1052 = vld [vmem:[#allocation2 + $0x1a8] sm:$0xff]
        %v1053 = vld [vmem:[#allocation2 + $0x1b8] sm:$0xff]
        %v1054 = vld [vmem:[#allocation2 + $0x1c8] sm:$0xff]
        %v1055 = vld [vmem:[#allocation2 + $0x1d8] sm:$0xff]
        %v1056 = vld [vmem:[#allocation2 + $0x1e8] sm:$0xff]
        %v1057 = vld [vmem:[#allocation2 + $0x1f8] sm:$0xff]
        %v1058 = vld [vmem:[#allocation2 + $0x208] sm:$0xff]
        %v1059 = vld [vmem:[#allocation2 + $0x218] sm:$0xff]
        %v1060 = vld [vmem:[#allocation2 + $0x228] sm:$0xff]
        %v1061 = vld [vmem:[#allocation2 + $0x238] sm:$0xf]
        %v1062 = vld [vmem:[#allocation2 + $0x170] sm:$0xff]
        %v1063 = vld [vmem:[#allocation2 + $0x180] sm:$0xff]
        %v1064 = vld [vmem:[#allocation2 + $0x190] sm:$0xff]
        %v1065 = vld [vmem:[#allocation2 + $0x1a0] sm:$0xff]
        %v1066 = vld [vmem:[#allocation2 + $0x1b0] sm:$0xff]
        %v1067 = vld [vmem:[#allocation2 + $0x1c0] sm:$0xff]
        %v1068 = vld [vmem:[#allocation2 + $0x1d0] sm:$0xff]
        %v1069 = vld [vmem:[#allocation2 + $0x1e0] sm:$0xff]
        %v1070 = vld [vmem:[#allocation2 + $0x1f0] sm:$0xff]
        %v1071 = vld [vmem:[#allocation2 + $0x200] sm:$0xff]
        %v1072 = vld [vmem:[#allocation2 + $0x210] sm:$0xff]
        %v1073 = vld [vmem:[#allocation2 + $0x220] sm:$0xff]
        %v1074 = vld [vmem:[#allocation2 + $0x230] sm:$0xff]
        %v1075 = vld [vmem:[#allocation2 + $0x240] sm:$0xff]
        %v1076 = vld [vmem:[#allocation2 + $0x250] sm:$0xff]
        %v1077 = vld [vmem:[#allocation2 + $0x260] sm:$0xff]
        %v1078 = vld [vmem:[#allocation2 + $0x270] sm:$0xff]
        %v1079 = vld [vmem:[#allocation2 + $0x280] sm:$0xff]
        %v1080 = vld [vmem:[#allocation2 + $0x290] sm:$0xff]
        %v1081 = vld [vmem:[#allocation2 + $0x2a0] sm:$0xff]
        %v1082 = vld [vmem:[#allocation2 + $0x2b0] sm:$0xff]
        %v1083 = vld [vmem:[#allocation2 + $0x2c0] sm:$0xff]
        %v1084 = vld [vmem:[#allocation2 + $0x2d0] sm:$0xff]
        %v1085 = vld [vmem:[#allocation2 + $0x2e0] sm:$0xff]
        %v1086 = vld [vmem:[#allocation2 + $0x2f0] sm:$0xff]
        %1088 = vst [vmem:[#allocation1] ss:$4 sm:$0xff] %v216
        %v1089 = vld.sshfl [vmem:[#allocation1] sm:$0xff pattern:$0x73625140]
        %v1090 = vld.sshfl [vmem:[#allocation1 + $0x8] sm:$0xff pattern:$0x73625140]
        %vm1092 = vcmask 588800
        %v1093 = vsel %vm1092, %v1090, 0
        %1095 = vmatpush.msra.mxu0 %v1077
        %1096 = vmatpush.msra.mxu0 %v1076
        %1097 = vmatpush.msra.mxu0 %v1075
        %1098 = vmatpush.msra.mxu0 %v1074
        %1099 = vmatpush.msra.mxu0 %v1073
        %1100 = vmatpush.msra.mxu0 %v1072
        %1101 = vmatpush.msra.mxu0 %v1071
        %1102 = vmatpush.msra.mxu0 %v1070
        %1103 = vmatpush.msra.mxu0 %v1069
        %1104 = vmatpush.msra.mxu0 %v1068
        %1105 = vmatpush.msra.mxu0 %v1067
        %1106 = vmatpush.msra.mxu0 %v1066
        %1107 = vmatpush.msra.mxu0 %v1065
        %1108 = vmatpush.msra.mxu0 %v1064
        %1109 = vmatpush.msra.mxu0 %v1063
        %1110 = vmatpush.msra.mxu0 %v1062
        %1111 = vmatmul.f32.gmra.mxu0 %v1089
        %v1112 = vpop.f32.mrf.mxu0
        %v1113 = vadd.f32 0.0, %v1112
        %1114 = vdwg.mxu0
        %1115 = vmatpush.msra.mxu0 0.0
        %1116 = vmatpush.msra.mxu0 0.0
        %1117 = vmatpush.msra.mxu0 0.0
        %1118 = vmatpush.msra.mxu0 0.0
        %1119 = vmatpush.msra.mxu0 0.0
        %1120 = vmatpush.msra.mxu0 0.0
        %1121 = vmatpush.msra.mxu0 0.0
        %1122 = vmatpush.msra.mxu0 %v1086
        %1123 = vmatpush.msra.mxu0 %v1085
        %1124 = vmatpush.msra.mxu0 %v1084
        %1125 = vmatpush.msra.mxu0 %v1083
        %1126 = vmatpush.msra.mxu0 %v1082
        %1127 = vmatpush.msra.mxu0 %v1081
        %1128 = vmatpush.msra.mxu0 %v1080
        %1129 = vmatpush.msra.mxu0 %v1079
        %1130 = vmatpush.msra.mxu0 %v1078
        %1131 = vmatmul.f32.gmra.mxu0 %v1093
        %v1132 = vpop.f32.mrf.mxu0
        %v1133 = vadd.f32 %v1113, %v1132
        %1134 = vdwg.mxu0
        %v1136 = vsel %vm674, %v1048, 0
        %v1139 = vsel %vm986, %v1061, 0
        %1141 = vmatpush.msra.mxu0 0.0
        %1142 = vmatpush.msra.mxu0 0.0
        %1143 = vmatpush.msra.mxu0 0.0
        %1144 = vmatpush.msra.mxu0 %v1139
        %1145 = vmatpush.msra.mxu0 %v1060
        %1146 = vmatpush.msra.mxu0 %v1059
        %1147 = vmatpush.msra.mxu0 %v1058
        %1148 = vmatpush.msra.mxu0 %v1057
        %1149 = vmatpush.msra.mxu0 %v1056
        %1150 = vmatpush.msra.mxu0 %v1055
        %1151 = vmatpush.msra.mxu0 %v1054
        %1152 = vmatpush.msra.mxu0 %v1053
        %1153 = vmatpush.msra.mxu0 %v1052
        %1154 = vmatpush.msra.mxu0 %v1051
        %1155 = vmatpush.msra.mxu0 %v1050
        %1156 = vmatpush.msra.mxu0 %v1049
        %1157 = vmatmul.f32.gmra.mxu0 %v1136
        %v1158 = vpop.f32.mrf.mxu0
        %v1159 = vadd.f32 %v1133, %v1158
        %1160 = vdwg.mxu0
        %v1161 = vld [vmem:[#allocation2 + $0x168] ss:$0 sm:$0xff]
        %v1162 = vadd.f32 %v1159, %v1161
        %v1163 = vmax.f32 %v1162, 0.0
        %v1164 = vld [vmem:[#allocation2 + $0x300] sm:$0xff]
        %v1165 = vld [vmem:[#allocation2 + $0x308] sm:$0xff]
        %v1166 = vld [vmem:[#allocation2 + $0x310] sm:$0xff]
        %v1167 = vld [vmem:[#allocation2 + $0x318] sm:$0xff]
        %v1168 = vld [vmem:[#allocation2 + $0x320] sm:$0xff]
        %v1169 = vld [vmem:[#allocation2 + $0x328] sm:$0xff]
        %v1170 = vld [vmem:[#allocation2 + $0x330] sm:$0xff]
        %v1171 = vld [vmem:[#allocation2 + $0x338] sm:$0xff]
        %v1172 = vld [vmem:[#allocation2 + $0x340] sm:$0xff]
        %v1173 = vld [vmem:[#allocation2 + $0x348] sm:$0xff]
        %v1174 = vld [vmem:[#allocation2 + $0x350] sm:$0xff]
        %v1175 = vld [vmem:[#allocation2 + $0x358] sm:$0xff]
        %v1176 = vld [vmem:[#allocation2 + $0x360] sm:$0xff]
        %v1177 = vld [vmem:[#allocation2 + $0x368] sm:$0xff]
        %v1178 = vld [vmem:[#allocation2 + $0x370] sm:$0xff]
        %v1179 = vld [vmem:[#allocation2 + $0x378] sm:$0xff]
        %v1180 = vld [vmem:[#allocation2 + $0x380] sm:$0xff]
        %v1181 = vld [vmem:[#allocation2 + $0x388] sm:$0xff]
        %v1182 = vld [vmem:[#allocation2 + $0x390] sm:$0xff]
        %v1183 = vld [vmem:[#allocation2 + $0x398] sm:$0xff]
        %v1184 = vld [vmem:[#allocation2 + $0x3a0] sm:$0xff]
        %v1185 = vld [vmem:[#allocation2 + $0x3a8] sm:$0xff]
        %v1186 = vld [vmem:[#allocation2 + $0x3b0] sm:$0xff]
        %v1187 = vld [vmem:[#allocation2 + $0x3b8] sm:$0xff]
        %v1188 = vld [vmem:[#allocation2 + $0x3c0] sm:$0xf]
        %v1189 = vld [vmem:[#allocation2 + $0x3c8] sm:$0xf]
        %s1190 = scalar_lea.vmem [#allocation2], 976
        %v1191 = vld [vmem:[%s1190] ss:$8 sm:$0x3]
        %v1193 = vperm.slane %v1191, 0
        %v1194 = vperm.slane %v1191, 1
        %v1198 = vsel %vm674, %v1163, 0
        %v1201 = vsel %vm986, %v1188, 0
        %v1204 = vsel %vm986, %v1189, 0
        %1206 = vmatpush.msra.mxu0 0.0
        %1207 = vmatpush.msra.mxu0 0.0
        %1208 = vmatpush.msra.mxu0 0.0
        %1209 = vmatpush.msra.mxu0 %v1201
        %1210 = vmatpush.msra.mxu0 %v1186
        %1211 = vmatpush.msra.mxu0 %v1184
        %1212 = vmatpush.msra.mxu0 %v1182
        %1213 = vmatpush.msra.mxu0 %v1180
        %1214 = vmatpush.msra.mxu0 %v1178
        %1215 = vmatpush.msra.mxu0 %v1176
        %1216 = vmatpush.msra.mxu0 %v1174
        %1217 = vmatpush.msra.mxu0 %v1172
        %1218 = vmatpush.msra.mxu0 %v1170
        %1219 = vmatpush.msra.mxu0 %v1168
        %1220 = vmatpush.msra.mxu0 %v1166
        %1221 = vmatpush.msra.mxu0 %v1164
        %1222 = vmatmul.f32.gmra.mxu0 %v1198
        %v1223 = vpop.f32.mrf.mxu0
        %v1224 = vadd.f32 %v1193, %v1223
        %1225 = vdwg.mxu0
        %1226 = vmatpush.msra.mxu0 0.0
        %1227 = vmatpush.msra.mxu0 0.0
        %1228 = vmatpush.msra.mxu0 0.0
        %1229 = vmatpush.msra.mxu0 %v1204
        %1230 = vmatpush.msra.mxu0 %v1187
        %1231 = vmatpush.msra.mxu0 %v1185
        %1232 = vmatpush.msra.mxu0 %v1183
        %1233 = vmatpush.msra.mxu0 %v1181
        %1234 = vmatpush.msra.mxu0 %v1179
        %1235 = vmatpush.msra.mxu0 %v1177
        %1236 = vmatpush.msra.mxu0 %v1175
        %1237 = vmatpush.msra.mxu0 %v1173
        %1238 = vmatpush.msra.mxu0 %v1171
        %1239 = vmatpush.msra.mxu0 %v1169
        %1240 = vmatpush.msra.mxu0 %v1167
        %1241 = vmatpush.msra.mxu0 %v1165
        %1242 = vmatmul.f32.gmra.mxu0 %v1198
        %v1243 = vpop.f32.mrf.mxu0
        %v1244 = vadd.f32 %v1194, %v1243
        %1245 = vdwg.mxu0
        %v1246 = vmax.f32 %v1224, 0.0
        %v1247 = vmax.f32 %v1244, 0.0
        %1248 = vst [vmem:[#allocation1] ss:$4 sm:$0xff] %v216
        %v1249 = vld.sshfl [vmem:[#allocation1] sm:$0xff pattern:$0x73625140]
        %v1250 = vld.sshfl [vmem:[#allocation1 + $0x8] sm:$0xff pattern:$0x73625140]
        %v1253 = vadd.f32 %v1246, %v1249
        %v1254 = vadd.f32 %v1247, %v1250
        %v1255 = vld [vmem:[#allocation2 + $0x3e0] sm:$0xff]
        %v1256 = vld [vmem:[#allocation2 + $0x3e8] sm:$0xff]
        %v1257 = vld [vmem:[#allocation2 + $0x3f0] sm:$0xff]
        %v1258 = vld [vmem:[#allocation2 + $0x3f8] sm:$0xff]
        %v1259 = vld [vmem:[#allocation2 + $0x400] sm:$0xff]
        %v1260 = vld [vmem:[#allocation2 + $0x408] sm:$0xff]
        %v1261 = vld [vmem:[#allocation2 + $0x410] sm:$0xff]
        %v1262 = vld [vmem:[#allocation2 + $0x418] sm:$0xff]
        %v1263 = vld [vmem:[#allocation2 + $0x420] sm:$0xff]
        %v1264 = vld [vmem:[#allocation2 + $0x428] sm:$0xff]
        %v1265 = vld [vmem:[#allocation2 + $0x430] sm:$0xff]
        %v1266 = vld [vmem:[#allocation2 + $0x438] sm:$0xff]
        %v1267 = vld [vmem:[#allocation2 + $0x440] sm:$0xff]
        %v1268 = vld [vmem:[#allocation2 + $0x448] sm:$0xff]
        %v1269 = vld [vmem:[#allocation2 + $0x450] sm:$0xff]
        %v1270 = vld [vmem:[#allocation2 + $0x458] sm:$0xff]
        %v1271 = vld [vmem:[#allocation2 + $0x460] sm:$0xff]
        %v1272 = vld [vmem:[#allocation2 + $0x468] sm:$0xff]
        %v1273 = vld [vmem:[#allocation2 + $0x470] sm:$0xff]
        %v1274 = vld [vmem:[#allocation2 + $0x478] sm:$0xff]
        %v1275 = vld [vmem:[#allocation2 + $0x480] sm:$0xff]
        %v1276 = vld [vmem:[#allocation2 + $0x488] sm:$0xff]
        %v1277 = vld [vmem:[#allocation2 + $0x490] sm:$0xff]
        %v1278 = vld [vmem:[#allocation2 + $0x498] sm:$0xff]
        %v1279 = vld [vmem:[#allocation2 + $0x4a0] sm:$0xff]
        %v1280 = vld [vmem:[#allocation2 + $0x4a8] sm:$0xff]
        %v1281 = vld [vmem:[#allocation2 + $0x4b0] sm:$0xff]
        %v1282 = vld [vmem:[#allocation2 + $0x4b8] sm:$0xff]
        %v1283 = vld [vmem:[#allocation2 + $0x4c0] sm:$0xff]
        %v1284 = vld [vmem:[#allocation2 + $0x4c8] sm:$0xff]
        %v1285 = vld [vmem:[#allocation2 + $0x4d0] sm:$0xff]
        %v1286 = vld [vmem:[#allocation2 + $0x4d8] sm:$0xff]
        %v1287 = vld [vmem:[#allocation2 + $0x4e0] sm:$0xff]
        %v1288 = vld [vmem:[#allocation2 + $0x4e8] sm:$0xff]
        %v1289 = vld [vmem:[#allocation2 + $0x4f0] sm:$0xff]
        %v1290 = vld [vmem:[#allocation2 + $0x4f8] sm:$0xff]
        %v1291 = vld [vmem:[#allocation2 + $0x500] sm:$0xff]
        %v1292 = vld [vmem:[#allocation2 + $0x508] sm:$0xff]
        %v1293 = vld [vmem:[#allocation2 + $0x510] sm:$0xff]
        %v1294 = vld [vmem:[#allocation2 + $0x518] sm:$0xff]
        %v1295 = vld [vmem:[#allocation2 + $0x520] sm:$0xff]
        %v1296 = vld [vmem:[#allocation2 + $0x528] sm:$0xff]
        %v1297 = vld [vmem:[#allocation2 + $0x530] sm:$0xff]
        %v1298 = vld [vmem:[#allocation2 + $0x538] sm:$0xff]
        %v1299 = vld [vmem:[#allocation2 + $0x540] sm:$0xff]
        %v1300 = vld [vmem:[#allocation2 + $0x548] sm:$0xff]
        %v1301 = vld [vmem:[#allocation2 + $0x550] sm:$0xff]
        %v1302 = vld [vmem:[#allocation2 + $0x558] sm:$0xff]
        %v1303 = vld [vmem:[#allocation2 + $0x560] sm:$0xff]
        %v1304 = vld [vmem:[#allocation2 + $0x568] sm:$0xff]
        %s1305 = scalar_lea.vmem [#allocation2], 1392
        %v1306 = vld [vmem:[%s1305] ss:$8 sm:$0x3]
        %v1308 = vperm.slane %v1306, 0
        %v1309 = vperm.slane %v1306, 1
        %v1313 = vsel %vm1092, %v1254, 0
        %1315 = vmatpush.msra.mxu0 %v1285
        %1316 = vmatpush.msra.mxu0 %v1283
        %1317 = vmatpush.msra.mxu0 %v1281
        %1318 = vmatpush.msra.mxu0 %v1279
        %1319 = vmatpush.msra.mxu0 %v1277
        %1320 = vmatpush.msra.mxu0 %v1275
        %1321 = vmatpush.msra.mxu0 %v1273
        %1322 = vmatpush.msra.mxu0 %v1271
        %1323 = vmatpush.msra.mxu0 %v1269
        %1324 = vmatpush.msra.mxu0 %v1267
        %1325 = vmatpush.msra.mxu0 %v1265
        %1326 = vmatpush.msra.mxu0 %v1263
        %1327 = vmatpush.msra.mxu0 %v1261
        %1328 = vmatpush.msra.mxu0 %v1259
        %1329 = vmatpush.msra.mxu0 %v1257
        %1330 = vmatpush.msra.mxu0 %v1255
        %1331 = vmatmul.f32.gmra.mxu0 %v1253
        %v1332 = vpop.f32.mrf.mxu0
        %v1333 = vadd.f32 %v1308, %v1332
        %1334 = vdwg.mxu0
        %1335 = vmatpush.msra.mxu0 0.0
        %1336 = vmatpush.msra.mxu0 0.0
        %1337 = vmatpush.msra.mxu0 0.0
        %1338 = vmatpush.msra.mxu0 0.0
        %1339 = vmatpush.msra.mxu0 0.0
        %1340 = vmatpush.msra.mxu0 0.0
        %1341 = vmatpush.msra.mxu0 0.0
        %1342 = vmatpush.msra.mxu0 %v1303
        %1343 = vmatpush.msra.mxu0 %v1301
        %1344 = vmatpush.msra.mxu0 %v1299
        %1345 = vmatpush.msra.mxu0 %v1297
        %1346 = vmatpush.msra.mxu0 %v1295
        %1347 = vmatpush.msra.mxu0 %v1293
        %1348 = vmatpush.msra.mxu0 %v1291
        %1349 = vmatpush.msra.mxu0 %v1289
        %1350 = vmatpush.msra.mxu0 %v1287
        %1351 = vmatmul.f32.gmra.mxu0 %v1313
        %v1352 = vpop.f32.mrf.mxu0
        %v1353 = vadd.f32 %v1333, %v1352
        %1354 = vdwg.mxu0
        %1355 = vmatpush.msra.mxu0 %v1286
        %1356 = vmatpush.msra.mxu0 %v1284
        %1357 = vmatpush.msra.mxu0 %v1282
        %1358 = vmatpush.msra.mxu0 %v1280
        %1359 = vmatpush.msra.mxu0 %v1278
        %1360 = vmatpush.msra.mxu0 %v1276
        %1361 = vmatpush.msra.mxu0 %v1274
        %1362 = vmatpush.msra.mxu0 %v1272
        %1363 = vmatpush.msra.mxu0 %v1270
        %1364 = vmatpush.msra.mxu0 %v1268
        %1365 = vmatpush.msra.mxu0 %v1266
        %1366 = vmatpush.msra.mxu0 %v1264
        %1367 = vmatpush.msra.mxu0 %v1262
        %1368 = vmatpush.msra.mxu0 %v1260
        %1369 = vmatpush.msra.mxu0 %v1258
        %1370 = vmatpush.msra.mxu0 %v1256
        %1371 = vmatmul.f32.gmra.mxu0 %v1253
        %v1372 = vpop.f32.mrf.mxu0
        %v1373 = vadd.f32 %v1309, %v1372
        %1374 = vdwg.mxu0
        %1375 = vmatpush.msra.mxu0 0.0
        %1376 = vmatpush.msra.mxu0 0.0
        %1377 = vmatpush.msra.mxu0 0.0
        %1378 = vmatpush.msra.mxu0 0.0
        %1379 = vmatpush.msra.mxu0 0.0
        %1380 = vmatpush.msra.mxu0 0.0
        %1381 = vmatpush.msra.mxu0 0.0
        %1382 = vmatpush.msra.mxu0 %v1304
        %1383 = vmatpush.msra.mxu0 %v1302
        %1384 = vmatpush.msra.mxu0 %v1300
        %1385 = vmatpush.msra.mxu0 %v1298
        %1386 = vmatpush.msra.mxu0 %v1296
        %1387 = vmatpush.msra.mxu0 %v1294
        %1388 = vmatpush.msra.mxu0 %v1292
        %1389 = vmatpush.msra.mxu0 %v1290
        %1390 = vmatpush.msra.mxu0 %v1288
        %1391 = vmatmul.f32.gmra.mxu0 %v1313
        %v1392 = vpop.f32.mrf.mxu0
        %v1393 = vadd.f32 %v1373, %v1392
        %1394 = vdwg.mxu0
        %v1395 = vmax.f32 %v1353, 0.0
        %v1396 = vmax.f32 %v1393, 0.0
        %1397 = vst [vmem:[%s207] sm:$0x3f] 0.0
        %v1400 = vrot.slane %v1396, 6
        %v1401 = vsel %vm578, %v1395, %v1400
        %vm1403 = vcmask 584706
        %vm1404 = vmor %vm1403, %vm578
        %1405 = vst.msk [vmem:[%s207] sm:$0xf] %vm1404, %v1401
        %vm1406 = vcmask 812032
        %1407 = vst.msk [vmem:[%s207 + $0x4] sm:$0x3] %vm1406, %v1038
        %p1408 = scmp.lt.s32.totalorder %s15, 1
        %s1409 = scalar_select %p1408, %s15, 1
        %s1410 = smul.addr %s1409, 3
        %s1411 = smul.addr %s1410, 2
        %s1412 = scalar_lea.vmem %s3, %s1411
        // Predicated region
        $region37: #{mymolgen_forward.1} parent=31 // pred_check
          %p1413 = pneg %p106
        $region38: #{mymolgen_forward.1} parent=31 // pred_check_branch
          %1415 = sbr.rel (%p1413) target = $region40
        $region39: #{mymolgen_forward.1} parent=31 // pred_region
          _
        $region40: #{mymolgen_forward.1} parent=31 // pred_fallthru
          _
      $region32: #{mymolgen_forward.1} parent=5 // pred_fallthru
        _
      %p1416 = scmp.le.s32.totalorder 2, %s10
      // Predicated region
      $region41: #{mymolgen_forward.1} parent=5 // pred_check
        %p1417 = pneg %p1416
      $region42: #{mymolgen_forward.1} parent=5 // pred_check_branch
        %1419 = sbr.rel (%p1417) target = $region44
      $region43: #{mymolgen_forward.1} parent=5 // pred_region
        %s1420 = ssub.s32 %s10, 2
        // Predicated region
        $region45: #{mymolgen_forward.1} parent=43 // pred_check
          %p1421 = pneg %p112
        $region46: #{mymolgen_forward.1} parent=43 // pred_check_branch
          %1423 = sbr.rel (%p1421) target = $region48
        $region47: #{mymolgen_forward.1} parent=43 // pred_region
          %p1424 = scmp.lt.s32.totalorder %s16, 1
          %s1425 = scalar_select %p1424, %s16, 1
          %s1426 = smul.addr %s1425, 3
          %s1427 = smul.addr %s1426, 2
          %s1428 = scalar_lea.vmem %s3, %s1427
        $region48: #{mymolgen_forward.1} parent=43 // pred_fallthru
          _
      $region44: #{mymolgen_forward.1} parent=5 // pred_fallthru
        _
    $region6: #{mymolgen_forward.1} parent=1 // loop_footer
      %s14 = sadd.s32 1, %s10
    $region7: #{mymolgen_forward.1} parent=1 // loop_footer_branch
      %9 = sbr.rel target = $region3
    $region8: #{mymolgen_forward.1} parent=1 // loop_exit
      _
    %1429 = vsyncpa [#allocation3], 1
    %s1430 = scalar_lea.sflag [#allocation3], 1
    %1431 = vsyncpa %s1430, 1

</llo_original>
